<compile_context>
chip_gen: v6e
topology: v6e:2x2x1
jax: 0.10.0
libtpu: 0.0.40
codegen_flags: <defaults>
</compile_context>

<pallas_src>
import jax
import jax.numpy as jnp
from jax import lax
from jax.experimental import pallas as pl
from jax.experimental.pallas import tpu as pltpu

_LN_EPS = 1e-6


def _dual_embedding_kernel(src_ids_ref,   # SMEM  (2, B, S) int32      (scalar prefetch)
                           word_hbm,      # ANY   (2, V, H) f32        (stays in HBM)
                           seg_ids_ref,   # VMEM  (1, 1, TILE_S, 1) int32
                           pos_ref,       # VMEM  (1, TILE_S, H) f32
                           segtab_ref,    # VMEM  (1, NS, H) f32
                           gamma_ref,     # VMEM  (1, 1, H) f32
                           beta_ref,      # VMEM  (1, 1, H) f32
                           out_ref,       # VMEM  (1, 1, TILE_S, H) f32
                           word_buf,      # VMEM  (TILE_S, H) f32 scratch
                           sems):         # DMA semaphores (TILE_S,)
    r = pl.program_id(0)    # stream index (0 / 1)
    b = pl.program_id(1)    # batch index
    st = pl.program_id(2)   # sequence tile index
    tile_s, hidden = word_buf.shape
    n_seg = segtab_ref.shape[1]
    vocab = word_hbm.shape[1]
    base = st * tile_s

    # ---- Word embedding: DMA gather, one row per token (issue all, then wait all).
    # tile_s is a small compile-time constant, so a static Python loop is fine; for
    # larger tiles this would become a fori_loop with unroll.
    copies = []
    for t in range(tile_s):
        tok = src_ids_ref[r, b, base + t]
        # Guard against out-of-range ids (torch nn.Embedding would raise).
        tok = jnp.clip(tok, 0, vocab - 1)
        cp = pltpu.make_async_copy(word_hbm.at[r, tok], word_buf.at[t], sems.at[t])
        cp.start()
        copies.append(cp)
    for cp in copies:
        cp.wait()

    # ---- Word + positional embedding (direct slab read via BlockSpec) on the VPU.
    x = word_buf[...] + pos_ref[0]

    # ---- Segment embedding: NS-way VPU select (NS is tiny; never touch the MXU).
    seg_vec = seg_ids_ref[0, 0]                              # (TILE_S, 1) int32
    for k in range(n_seg):
        mask = (seg_vec == k).astype(jnp.float32)            # (TILE_S, 1)
        x = x + mask * segtab_ref[0, k:k + 1, :]             # broadcast with (1, H)

    # ---- LayerNorm over hidden, single-pass mean / variance.
    inv_h = 1.0 / hidden
    s1 = jnp.sum(x, axis=-1, keepdims=True)
    s2 = jnp.sum(x * x, axis=-1, keepdims=True)
    mean = s1 * inv_h
    var = s2 * inv_h - mean * mean
    inv_std = lax.rsqrt(var + _LN_EPS)
    y = (x - mean) * inv_std * gamma_ref[0] + beta_ref[0]

    # TODO(synk): train-mode dropout (stateful PRNG masking) is not applied here;
    # nn.Dropout is identity at inference.
    out_ref[0, 0] = y.astype(out_ref.dtype)


def dual_embedding_forward(src_pair, seg_pair, params_0, params_1, *, tile_s=None):
    """
    src_pair / seg_pair: tuples of two int32 arrays, each [batch, seq]
    returns (emb_0, emb_1), each [batch, seq, hidden] float32
    Assumes both streams share vocab / max_len / hidden (as in the reference config;
    tied weights simply duplicate the table in the stacked parameter).
    """
    src_0, src_1 = src_pair
    seg_0, seg_1 = seg_pair
    B, S = src_0.shape
    V, H = params_0["word"].shape
    L = params_0["pos"].shape[0]
    NS = params_0["seg"].shape[0]
    assert S <= L, "sequence length exceeds positional-embedding table"

    if tile_s is None:
        tile_s = S if S <= 64 else 64
    assert S % tile_s == 0 and tile_s % 8 == 0, "tile_s must divide S and be a multiple of 8"

    # Stack the two streams along a leading grid axis (stream-level parallelism;
    # shards across the two TensorCores on v7x).
    word = jnp.stack([params_0["word"], params_1["word"]])       # (2, V, H)  -> HBM
    pos = jnp.stack([params_0["pos"], params_1["pos"]])          # (2, L, H)
    seg = jnp.stack([params_0["seg"], params_1["seg"]])          # (2, NS, H)
    gamma = jnp.stack([params_0["gamma"], params_1["gamma"]])    # (2, 1, H)
    beta = jnp.stack([params_0["beta"], params_1["beta"]])       # (2, 1, H)

    src_ids = jnp.stack([src_0, src_1]).astype(jnp.int32)              # (2, B, S) -> SMEM
    seg_ids = jnp.stack([seg_0, seg_1]).astype(jnp.int32)[..., None]   # (2, B, S, 1)

    grid = (2, B, S // tile_s)

    toks = 2 * B * S
    cost = pl.CostEstimate(
        flops=toks * 12 * H,                    # adds + select + LayerNorm, all VPU
        transcendentals=toks,                   # rsqrt per token
        bytes_accessed=2 * toks * H * 4         # word rows in + output out
        + 2 * S * H * 4 + 2 * NS * H * 4        # pos / seg tables
        + 2 * toks * 4,                         # indices
    )

    out = pl.pallas_call(
        _dual_embedding_kernel,
        out_shape=jax.ShapeDtypeStruct((2, B, S, H), jnp.float32),
        grid_spec=pltpu.PrefetchScalarGridSpec(
            num_scalar_prefetch=1,              # src token ids -> SMEM
            grid=grid,
            in_specs=[
                pl.BlockSpec(memory_space=pl.ANY),                               # word table (HBM)
                pl.BlockSpec((1, 1, tile_s, 1), lambda r, b, s, ids: (r, b, s, 0)),  # seg ids
                pl.BlockSpec((1, tile_s, H), lambda r, b, s, ids: (r, s, 0)),        # pos slab
                pl.BlockSpec((1, NS, H), lambda r, b, s, ids: (r, 0, 0)),            # seg table
                pl.BlockSpec((1, 1, H), lambda r, b, s, ids: (r, 0, 0)),             # gamma
                pl.BlockSpec((1, 1, H), lambda r, b, s, ids: (r, 0, 0)),             # beta
            ],
            out_specs=pl.BlockSpec((1, 1, tile_s, H), lambda r, b, s, ids: (r, b, s, 0)),
            scratch_shapes=[
                pltpu.VMEM((tile_s, H), jnp.float32),      # gathered word rows
                pltpu.SemaphoreType.DMA((tile_s,)),        # one sem per row DMA
            ],
        ),
        compiler_params=pltpu.CompilerParams(
            dimension_semantics=("parallel", "parallel", "arbitrary"),
            vmem_limit_bytes=32 * 1024 * 1024,
        ),
        cost_estimate=cost,
    )(src_ids, word, seg_ids, pos, seg, gamma, beta)

    return out[0], out[1]


def make_stream_params(key, vocab_size, max_len, n_seg, hidden):
    kw, kp, ks, kg, kb = jax.random.split(key, 5)
    return {
        "word": (0.02 * jax.random.normal(kw, (vocab_size, hidden))).astype(jnp.float32),
        "pos": (0.02 * jax.random.normal(kp, (max_len, hidden))).astype(jnp.float32),
        "seg": (0.02 * jax.random.normal(ks, (n_seg, hidden))).astype(jnp.float32),
        "gamma": (1.0 + 0.1 * jax.random.normal(kg, (1, hidden))).astype(jnp.float32),
        "beta": (0.02 * jax.random.normal(kb, (1, hidden))).astype(jnp.float32),
    }


if __name__ == "__main__":
    B, S, H = 2, 8, 128
    VOCAB, MAX_LEN, N_SEG = 64, 16, 3

    key = jax.random.PRNGKey(0)
    k0, k1, ks0, ks1, kg0, kg1 = jax.random.split(key, 6)

    # tie_weights = False -> independent stream parameters.
    params_0 = make_stream_params(k0, VOCAB, MAX_LEN, N_SEG, H)
    params_1 = make_stream_params(k1, VOCAB, MAX_LEN, N_SEG, H)

    src_0 = jax.random.randint(ks0, (B, S), 0, VOCAB, dtype=jnp.int32)
    src_1 = jax.random.randint(ks1, (B, S), 0, VOCAB, dtype=jnp.int32)
    seg_0 = jax.random.randint(kg0, (B, S), 0, N_SEG, dtype=jnp.int32)
    seg_1 = jax.random.randint(kg1, (B, S), 0, N_SEG, dtype=jnp.int32)

    emb_0, emb_1 = dual_embedding_forward((src_0, src_1), (seg_0, seg_1),
                                          params_0, params_1)
    jax.block_until_ready((emb_0, emb_1))

    # Pure-JAX reference check.
    def ref_stream(src, seg, p):
        pos = jnp.arange(S, dtype=jnp.int32)[None, :]
        e = p["word"][src] + p["pos"][pos] + p["seg"][seg]
        mu = e.mean(-1, keepdims=True)
        var = ((e - mu) ** 2).mean(-1, keepdims=True)
        return (e - mu) / jnp.sqrt(var + _LN_EPS) * p["gamma"][0] + p["beta"][0]

    ref_0 = ref_stream(src_0, seg_0, params_0)
    ref_1 = ref_stream(src_1, seg_1, params_1)
    assert emb_0.shape == (B, S, H) and emb_1.shape == (B, S, H)
    assert float(jnp.max(jnp.abs(emb_0 - ref_0))) < 1e-4
    assert float(jnp.max(jnp.abs(emb_1 - ref_1))) < 1e-4

    print("KERNEL_OK")
</pallas_src>

<mosaic_0001>
module attributes {stable_mosaic.version = 11 : i64} {
  func.func @_dual_embedding_kernel(%arg0: i32, %arg1: i32, %arg2: i32, %arg3: memref<2x2x8xi32, #tpu.memory_space<smem>>, %arg4: memref<2x64x128xf32, #tpu.memory_space<any>>, %arg5: memref<1x1x8x1xi32, #tpu.memory_space<vmem>>, %arg6: memref<1x8x128xf32, #tpu.memory_space<vmem>>, %arg7: memref<1x3x128xf32, #tpu.memory_space<vmem>>, %arg8: memref<1x1x128xf32, #tpu.memory_space<vmem>>, %arg9: memref<1x1x128xf32, #tpu.memory_space<vmem>>, %arg10: memref<1x1x8x128xf32, #tpu.memory_space<vmem>>, %arg11: memref<8x128xf32, #tpu.memory_space<vmem>>, %arg12: memref<8x!tpu.dma_semaphore, #tpu.memory_space<semaphore_mem>>) attributes {dimension_semantics = [#tpu.dimension_semantics<parallel>, #tpu.dimension_semantics<parallel>, #tpu.dimension_semantics<arbitrary>], iteration_bounds = array<i64: 2, 2, 1>, scalar_prefetch = 1 : i64, scratch_operands = 2 : i64, tpu.core_type = #tpu.core_type<tc>, window_params = [{}, {transform_indices = @transform_1, window_bounds = array<i64: 1, 1, 8, 1>}, {transform_indices = @transform_2, window_bounds = array<i64: 1, 8, 128>}, {transform_indices = @transform_3, window_bounds = array<i64: 1, 3, 128>}, {transform_indices = @transform_4, window_bounds = array<i64: 1, 1, 128>}, {transform_indices = @transform_5, window_bounds = array<i64: 1, 1, 128>}, {transform_indices = @transform_6, window_bounds = array<i64: 1, 1, 8, 128>}]} {
    %c8_i32 = arith.constant 8 : i32
    %0 = arith.muli %arg2, %c8_i32 : i32
    %c0_i32 = arith.constant 0 : i32
    %1 = arith.addi %0, %c0_i32 : i32
    %2 = arith.index_cast %arg0 : i32 to index
    %3 = arith.index_cast %arg1 : i32 to index
    %4 = arith.index_cast %1 : i32 to index
    %5 = memref.load %arg3[%2, %3, %4] : memref<2x2x8xi32, #tpu.memory_space<smem>>
    %c0_i32_0 = arith.constant 0 : i32
    %c63_i32 = arith.constant 63 : i32
    %6 = arith.maxsi %c0_i32_0, %5 : i32
    %7 = arith.minsi %c63_i32, %6 : i32
    %c0_i32_1 = arith.constant 0 : i32
    %c0_i32_2 = arith.constant 0 : i32
    %c0_i32_3 = arith.constant 0 : i32
    %8 = tpu.memref_slice %arg4[%arg0, %7, %c0_i32_3] : memref<2x64x128xf32, #tpu.memory_space<any>> -> memref<1x1x128xf32, #tpu.memory_space<any>>
    %9 = tpu.memref_squeeze %8 : memref<1x1x128xf32, #tpu.memory_space<any>> -> memref<128xf32, #tpu.memory_space<any>>
    %c0_i32_4 = arith.constant 0 : i32
    %10 = tpu.memref_slice %arg11[%c0_i32_1, %c0_i32_4] : memref<8x128xf32, #tpu.memory_space<vmem>> -> memref<1x128xf32, #tpu.memory_space<vmem>>
    %11 = tpu.memref_squeeze %10 : memref<1x128xf32, #tpu.memory_space<vmem>> -> memref<128xf32, #tpu.memory_space<vmem>>
    %12 = tpu.memref_slice %arg12[%c0_i32_2] : memref<8x!tpu.dma_semaphore, #tpu.memory_space<semaphore_mem>> -> memref<1x!tpu.dma_semaphore, #tpu.memory_space<semaphore_mem>>
    %13 = tpu.memref_squeeze %12 : memref<1x!tpu.dma_semaphore, #tpu.memory_space<semaphore_mem>> -> memref<!tpu.dma_semaphore, #tpu.memory_space<semaphore_mem>>
    tpu.enqueue_dma source(%9 : memref<128xf32, #tpu.memory_space<any>>) target(%11 : memref<128xf32, #tpu.memory_space<vmem>>) target_semaphore(%13 : memref<!tpu.dma_semaphore, #tpu.memory_space<semaphore_mem>>)
    %c1_i32 = arith.constant 1 : i32
    %14 = arith.addi %0, %c1_i32 : i32
    %15 = arith.index_cast %arg0 : i32 to index
    %16 = arith.index_cast %arg1 : i32 to index
    %17 = arith.index_cast %14 : i32 to index
    %18 = memref.load %arg3[%15, %16, %17] : memref<2x2x8xi32, #tpu.memory_space<smem>>
    %c0_i32_5 = arith.constant 0 : i32
    %c63_i32_6 = arith.constant 63 : i32
    %19 = arith.maxsi %c0_i32_5, %18 : i32
    %20 = arith.minsi %c63_i32_6, %19 : i32
    %c1_i32_7 = arith.constant 1 : i32
    %c1_i32_8 = arith.constant 1 : i32
    %c0_i32_9 = arith.constant 0 : i32
    %21 = tpu.memref_slice %arg4[%arg0, %20, %c0_i32_9] : memref<2x64x128xf32, #tpu.memory_space<any>> -> memref<1x1x128xf32, #tpu.memory_space<any>>
    %22 = tpu.memref_squeeze %21 : memref<1x1x128xf32, #tpu.memory_space<any>> -> memref<128xf32, #tpu.memory_space<any>>
    %c0_i32_10 = arith.constant 0 : i32
    %23 = tpu.memref_slice %arg11[%c1_i32_7, %c0_i32_10] : memref<8x128xf32, #tpu.memory_space<vmem>> -> memref<1x128xf32, #tpu.memory_space<vmem>>
    %24 = tpu.memref_squeeze %23 : memref<1x128xf32, #tpu.memory_space<vmem>> -> memref<128xf32, #tpu.memory_space<vmem>>
    %25 = tpu.memref_slice %arg12[%c1_i32_8] : memref<8x!tpu.dma_semaphore, #tpu.memory_space<semaphore_mem>> -> memref<1x!tpu.dma_semaphore, #tpu.memory_space<semaphore_mem>>
    %26 = tpu.memref_squeeze %25 : memref<1x!tpu.dma_semaphore, #tpu.memory_space<semaphore_mem>> -> memref<!tpu.dma_semaphore, #tpu.memory_space<semaphore_mem>>
    tpu.enqueue_dma source(%22 : memref<128xf32, #tpu.memory_space<any>>) target(%24 : memref<128xf32, #tpu.memory_space<vmem>>) target_semaphore(%26 : memref<!tpu.dma_semaphore, #tpu.memory_space<semaphore_mem>>)
    %c2_i32 = arith.constant 2 : i32
    %27 = arith.addi %0, %c2_i32 : i32
    %28 = arith.index_cast %arg0 : i32 to index
    %29 = arith.index_cast %arg1 : i32 to index
    %30 = arith.index_cast %27 : i32 to index
    %31 = memref.load %arg3[%28, %29, %30] : memref<2x2x8xi32, #tpu.memory_space<smem>>
    %c0_i32_11 = arith.constant 0 : i32
    %c63_i32_12 = arith.constant 63 : i32
    %32 = arith.maxsi %c0_i32_11, %31 : i32
    %33 = arith.minsi %c63_i32_12, %32 : i32
    %c2_i32_13 = arith.constant 2 : i32
    %c2_i32_14 = arith.constant 2 : i32
    %c0_i32_15 = arith.constant 0 : i32
    %34 = tpu.memref_slice %arg4[%arg0, %33, %c0_i32_15] : memref<2x64x128xf32, #tpu.memory_space<any>> -> memref<1x1x128xf32, #tpu.memory_space<any>>
    %35 = tpu.memref_squeeze %34 : memref<1x1x128xf32, #tpu.memory_space<any>> -> memref<128xf32, #tpu.memory_space<any>>
    %c0_i32_16 = arith.constant 0 : i32
    %36 = tpu.memref_slice %arg11[%c2_i32_13, %c0_i32_16] : memref<8x128xf32, #tpu.memory_space<vmem>> -> memref<1x128xf32, #tpu.memory_space<vmem>>
    %37 = tpu.memref_squeeze %36 : memref<1x128xf32, #tpu.memory_space<vmem>> -> memref<128xf32, #tpu.memory_space<vmem>>
    %38 = tpu.memref_slice %arg12[%c2_i32_14] : memref<8x!tpu.dma_semaphore, #tpu.memory_space<semaphore_mem>> -> memref<1x!tpu.dma_semaphore, #tpu.memory_space<semaphore_mem>>
    %39 = tpu.memref_squeeze %38 : memref<1x!tpu.dma_semaphore, #tpu.memory_space<semaphore_mem>> -> memref<!tpu.dma_semaphore, #tpu.memory_space<semaphore_mem>>
    tpu.enqueue_dma source(%35 : memref<128xf32, #tpu.memory_space<any>>) target(%37 : memref<128xf32, #tpu.memory_space<vmem>>) target_semaphore(%39 : memref<!tpu.dma_semaphore, #tpu.memory_space<semaphore_mem>>)
    %c3_i32 = arith.constant 3 : i32
    %40 = arith.addi %0, %c3_i32 : i32
    %41 = arith.index_cast %arg0 : i32 to index
    %42 = arith.index_cast %arg1 : i32 to index
    %43 = arith.index_cast %40 : i32 to index
    %44 = memref.load %arg3[%41, %42, %43] : memref<2x2x8xi32, #tpu.memory_space<smem>>
    %c0_i32_17 = arith.constant 0 : i32
    %c63_i32_18 = arith.constant 63 : i32
    %45 = arith.maxsi %c0_i32_17, %44 : i32
    %46 = arith.minsi %c63_i32_18, %45 : i32
    %c3_i32_19 = arith.constant 3 : i32
    %c3_i32_20 = arith.constant 3 : i32
    %c0_i32_21 = arith.constant 0 : i32
    %47 = tpu.memref_slice %arg4[%arg0, %46, %c0_i32_21] : memref<2x64x128xf32, #tpu.memory_space<any>> -> memref<1x1x128xf32, #tpu.memory_space<any>>
    %48 = tpu.memref_squeeze %47 : memref<1x1x128xf32, #tpu.memory_space<any>> -> memref<128xf32, #tpu.memory_space<any>>
    %c0_i32_22 = arith.constant 0 : i32
    %49 = tpu.memref_slice %arg11[%c3_i32_19, %c0_i32_22] : memref<8x128xf32, #tpu.memory_space<vmem>> -> memref<1x128xf32, #tpu.memory_space<vmem>>
    %50 = tpu.memref_squeeze %49 : memref<1x128xf32, #tpu.memory_space<vmem>> -> memref<128xf32, #tpu.memory_space<vmem>>
    %51 = tpu.memref_slice %arg12[%c3_i32_20] : memref<8x!tpu.dma_semaphore, #tpu.memory_space<semaphore_mem>> -> memref<1x!tpu.dma_semaphore, #tpu.memory_space<semaphore_mem>>
    %52 = tpu.memref_squeeze %51 : memref<1x!tpu.dma_semaphore, #tpu.memory_space<semaphore_mem>> -> memref<!tpu.dma_semaphore, #tpu.memory_space<semaphore_mem>>
    tpu.enqueue_dma source(%48 : memref<128xf32, #tpu.memory_space<any>>) target(%50 : memref<128xf32, #tpu.memory_space<vmem>>) target_semaphore(%52 : memref<!tpu.dma_semaphore, #tpu.memory_space<semaphore_mem>>)
    %c4_i32 = arith.constant 4 : i32
    %53 = arith.addi %0, %c4_i32 : i32
    %54 = arith.index_cast %arg0 : i32 to index
    %55 = arith.index_cast %arg1 : i32 to index
    %56 = arith.index_cast %53 : i32 to index
    %57 = memref.load %arg3[%54, %55, %56] : memref<2x2x8xi32, #tpu.memory_space<smem>>
    %c0_i32_23 = arith.constant 0 : i32
    %c63_i32_24 = arith.constant 63 : i32
    %58 = arith.maxsi %c0_i32_23, %57 : i32
    %59 = arith.minsi %c63_i32_24, %58 : i32
    %c4_i32_25 = arith.constant 4 : i32
    %c4_i32_26 = arith.constant 4 : i32
    %c0_i32_27 = arith.constant 0 : i32
    %60 = tpu.memref_slice %arg4[%arg0, %59, %c0_i32_27] : memref<2x64x128xf32, #tpu.memory_space<any>> -> memref<1x1x128xf32, #tpu.memory_space<any>>
    %61 = tpu.memref_squeeze %60 : memref<1x1x128xf32, #tpu.memory_space<any>> -> memref<128xf32, #tpu.memory_space<any>>
    %c0_i32_28 = arith.constant 0 : i32
    %62 = tpu.memref_slice %arg11[%c4_i32_25, %c0_i32_28] : memref<8x128xf32, #tpu.memory_space<vmem>> -> memref<1x128xf32, #tpu.memory_space<vmem>>
    %63 = tpu.memref_squeeze %62 : memref<1x128xf32, #tpu.memory_space<vmem>> -> memref<128xf32, #tpu.memory_space<vmem>>
    %64 = tpu.memref_slice %arg12[%c4_i32_26] : memref<8x!tpu.dma_semaphore, #tpu.memory_space<semaphore_mem>> -> memref<1x!tpu.dma_semaphore, #tpu.memory_space<semaphore_mem>>
    %65 = tpu.memref_squeeze %64 : memref<1x!tpu.dma_semaphore, #tpu.memory_space<semaphore_mem>> -> memref<!tpu.dma_semaphore, #tpu.memory_space<semaphore_mem>>
    tpu.enqueue_dma source(%61 : memref<128xf32, #tpu.memory_space<any>>) target(%63 : memref<128xf32, #tpu.memory_space<vmem>>) target_semaphore(%65 : memref<!tpu.dma_semaphore, #tpu.memory_space<semaphore_mem>>)
    %c5_i32 = arith.constant 5 : i32
    %66 = arith.addi %0, %c5_i32 : i32
    %67 = arith.index_cast %arg0 : i32 to index
    %68 = arith.index_cast %arg1 : i32 to index
    %69 = arith.index_cast %66 : i32 to index
    %70 = memref.load %arg3[%67, %68, %69] : memref<2x2x8xi32, #tpu.memory_space<smem>>
    %c0_i32_29 = arith.constant 0 : i32
    %c63_i32_30 = arith.constant 63 : i32
    %71 = arith.maxsi %c0_i32_29, %70 : i32
    %72 = arith.minsi %c63_i32_30, %71 : i32
    %c5_i32_31 = arith.constant 5 : i32
    %c5_i32_32 = arith.constant 5 : i32
    %c0_i32_33 = arith.constant 0 : i32
    %73 = tpu.memref_slice %arg4[%arg0, %72, %c0_i32_33] : memref<2x64x128xf32, #tpu.memory_space<any>> -> memref<1x1x128xf32, #tpu.memory_space<any>>
    %74 = tpu.memref_squeeze %73 : memref<1x1x128xf32, #tpu.memory_space<any>> -> memref<128xf32, #tpu.memory_space<any>>
    %c0_i32_34 = arith.constant 0 : i32
    %75 = tpu.memref_slice %arg11[%c5_i32_31, %c0_i32_34] : memref<8x128xf32, #tpu.memory_space<vmem>> -> memref<1x128xf32, #tpu.memory_space<vmem>>
    %76 = tpu.memref_squeeze %75 : memref<1x128xf32, #tpu.memory_space<vmem>> -> memref<128xf32, #tpu.memory_space<vmem>>
    %77 = tpu.memref_slice %arg12[%c5_i32_32] : memref<8x!tpu.dma_semaphore, #tpu.memory_space<semaphore_mem>> -> memref<1x!tpu.dma_semaphore, #tpu.memory_space<semaphore_mem>>
    %78 = tpu.memref_squeeze %77 : memref<1x!tpu.dma_semaphore, #tpu.memory_space<semaphore_mem>> -> memref<!tpu.dma_semaphore, #tpu.memory_space<semaphore_mem>>
    tpu.enqueue_dma source(%74 : memref<128xf32, #tpu.memory_space<any>>) target(%76 : memref<128xf32, #tpu.memory_space<vmem>>) target_semaphore(%78 : memref<!tpu.dma_semaphore, #tpu.memory_space<semaphore_mem>>)
    %c6_i32 = arith.constant 6 : i32
    %79 = arith.addi %0, %c6_i32 : i32
    %80 = arith.index_cast %arg0 : i32 to index
    %81 = arith.index_cast %arg1 : i32 to index
    %82 = arith.index_cast %79 : i32 to index
    %83 = memref.load %arg3[%80, %81, %82] : memref<2x2x8xi32, #tpu.memory_space<smem>>
    %c0_i32_35 = arith.constant 0 : i32
    %c63_i32_36 = arith.constant 63 : i32
    %84 = arith.maxsi %c0_i32_35, %83 : i32
    %85 = arith.minsi %c63_i32_36, %84 : i32
    %c6_i32_37 = arith.constant 6 : i32
    %c6_i32_38 = arith.constant 6 : i32
    %c0_i32_39 = arith.constant 0 : i32
    %86 = tpu.memref_slice %arg4[%arg0, %85, %c0_i32_39] : memref<2x64x128xf32, #tpu.memory_space<any>> -> memref<1x1x128xf32, #tpu.memory_space<any>>
    %87 = tpu.memref_squeeze %86 : memref<1x1x128xf32, #tpu.memory_space<any>> -> memref<128xf32, #tpu.memory_space<any>>
    %c0_i32_40 = arith.constant 0 : i32
    %88 = tpu.memref_slice %arg11[%c6_i32_37, %c0_i32_40] : memref<8x128xf32, #tpu.memory_space<vmem>> -> memref<1x128xf32, #tpu.memory_space<vmem>>
    %89 = tpu.memref_squeeze %88 : memref<1x128xf32, #tpu.memory_space<vmem>> -> memref<128xf32, #tpu.memory_space<vmem>>
    %90 = tpu.memref_slice %arg12[%c6_i32_38] : memref<8x!tpu.dma_semaphore, #tpu.memory_space<semaphore_mem>> -> memref<1x!tpu.dma_semaphore, #tpu.memory_space<semaphore_mem>>
    %91 = tpu.memref_squeeze %90 : memref<1x!tpu.dma_semaphore, #tpu.memory_space<semaphore_mem>> -> memref<!tpu.dma_semaphore, #tpu.memory_space<semaphore_mem>>
    tpu.enqueue_dma source(%87 : memref<128xf32, #tpu.memory_space<any>>) target(%89 : memref<128xf32, #tpu.memory_space<vmem>>) target_semaphore(%91 : memref<!tpu.dma_semaphore, #tpu.memory_space<semaphore_mem>>)
    %c7_i32 = arith.constant 7 : i32
    %92 = arith.addi %0, %c7_i32 : i32
    %93 = arith.index_cast %arg0 : i32 to index
    %94 = arith.index_cast %arg1 : i32 to index
    %95 = arith.index_cast %92 : i32 to index
    %96 = memref.load %arg3[%93, %94, %95] : memref<2x2x8xi32, #tpu.memory_space<smem>>
    %c0_i32_41 = arith.constant 0 : i32
    %c63_i32_42 = arith.constant 63 : i32
    %97 = arith.maxsi %c0_i32_41, %96 : i32
    %98 = arith.minsi %c63_i32_42, %97 : i32
    %c7_i32_43 = arith.constant 7 : i32
    %c7_i32_44 = arith.constant 7 : i32
    %c0_i32_45 = arith.constant 0 : i32
    %99 = tpu.memref_slice %arg4[%arg0, %98, %c0_i32_45] : memref<2x64x128xf32, #tpu.memory_space<any>> -> memref<1x1x128xf32, #tpu.memory_space<any>>
    %100 = tpu.memref_squeeze %99 : memref<1x1x128xf32, #tpu.memory_space<any>> -> memref<128xf32, #tpu.memory_space<any>>
    %c0_i32_46 = arith.constant 0 : i32
    %101 = tpu.memref_slice %arg11[%c7_i32_43, %c0_i32_46] : memref<8x128xf32, #tpu.memory_space<vmem>> -> memref<1x128xf32, #tpu.memory_space<vmem>>
    %102 = tpu.memref_squeeze %101 : memref<1x128xf32, #tpu.memory_space<vmem>> -> memref<128xf32, #tpu.memory_space<vmem>>
    %103 = tpu.memref_slice %arg12[%c7_i32_44] : memref<8x!tpu.dma_semaphore, #tpu.memory_space<semaphore_mem>> -> memref<1x!tpu.dma_semaphore, #tpu.memory_space<semaphore_mem>>
    %104 = tpu.memref_squeeze %103 : memref<1x!tpu.dma_semaphore, #tpu.memory_space<semaphore_mem>> -> memref<!tpu.dma_semaphore, #tpu.memory_space<semaphore_mem>>
    tpu.enqueue_dma source(%100 : memref<128xf32, #tpu.memory_space<any>>) target(%102 : memref<128xf32, #tpu.memory_space<vmem>>) target_semaphore(%104 : memref<!tpu.dma_semaphore, #tpu.memory_space<semaphore_mem>>)
    %c0_i32_47 = arith.constant 0 : i32
    %c0_i32_48 = arith.constant 0 : i32
    %c0_i32_49 = arith.constant 0 : i32
    %105 = tpu.memref_slice %arg4[%arg0, %7, %c0_i32_49] : memref<2x64x128xf32, #tpu.memory_space<any>> -> memref<1x1x128xf32, #tpu.memory_space<any>>
    %106 = tpu.memref_squeeze %105 : memref<1x1x128xf32, #tpu.memory_space<any>> -> memref<128xf32, #tpu.memory_space<any>>
    %c0_i32_50 = arith.constant 0 : i32
    %107 = tpu.memref_slice %arg11[%c0_i32_47, %c0_i32_50] : memref<8x128xf32, #tpu.memory_space<vmem>> -> memref<1x128xf32, #tpu.memory_space<vmem>>
    %108 = tpu.memref_squeeze %107 : memref<1x128xf32, #tpu.memory_space<vmem>> -> memref<128xf32, #tpu.memory_space<vmem>>
    %109 = tpu.memref_slice %arg12[%c0_i32_48] : memref<8x!tpu.dma_semaphore, #tpu.memory_space<semaphore_mem>> -> memref<1x!tpu.dma_semaphore, #tpu.memory_space<semaphore_mem>>
    %110 = tpu.memref_squeeze %109 : memref<1x!tpu.dma_semaphore, #tpu.memory_space<semaphore_mem>> -> memref<!tpu.dma_semaphore, #tpu.memory_space<semaphore_mem>>
    tpu.wait_dma2 semaphore(%110 : memref<!tpu.dma_semaphore, #tpu.memory_space<semaphore_mem>>) src(%106 : memref<128xf32, #tpu.memory_space<any>>) dst(%108 : memref<128xf32, #tpu.memory_space<vmem>>)
    %c1_i32_51 = arith.constant 1 : i32
    %c1_i32_52 = arith.constant 1 : i32
    %c0_i32_53 = arith.constant 0 : i32
    %111 = tpu.memref_slice %arg4[%arg0, %20, %c0_i32_53] : memref<2x64x128xf32, #tpu.memory_space<any>> -> memref<1x1x128xf32, #tpu.memory_space<any>>
    %112 = tpu.memref_squeeze %111 : memref<1x1x128xf32, #tpu.memory_space<any>> -> memref<128xf32, #tpu.memory_space<any>>
    %c0_i32_54 = arith.constant 0 : i32
    %113 = tpu.memref_slice %arg11[%c1_i32_51, %c0_i32_54] : memref<8x128xf32, #tpu.memory_space<vmem>> -> memref<1x128xf32, #tpu.memory_space<vmem>>
    %114 = tpu.memref_squeeze %113 : memref<1x128xf32, #tpu.memory_space<vmem>> -> memref<128xf32, #tpu.memory_space<vmem>>
    %115 = tpu.memref_slice %arg12[%c1_i32_52] : memref<8x!tpu.dma_semaphore, #tpu.memory_space<semaphore_mem>> -> memref<1x!tpu.dma_semaphore, #tpu.memory_space<semaphore_mem>>
    %116 = tpu.memref_squeeze %115 : memref<1x!tpu.dma_semaphore, #tpu.memory_space<semaphore_mem>> -> memref<!tpu.dma_semaphore, #tpu.memory_space<semaphore_mem>>
    tpu.wait_dma2 semaphore(%116 : memref<!tpu.dma_semaphore, #tpu.memory_space<semaphore_mem>>) src(%112 : memref<128xf32, #tpu.memory_space<any>>) dst(%114 : memref<128xf32, #tpu.memory_space<vmem>>)
    %c2_i32_55 = arith.constant 2 : i32
    %c2_i32_56 = arith.constant 2 : i32
    %c0_i32_57 = arith.constant 0 : i32
    %117 = tpu.memref_slice %arg4[%arg0, %33, %c0_i32_57] : memref<2x64x128xf32, #tpu.memory_space<any>> -> memref<1x1x128xf32, #tpu.memory_space<any>>
    %118 = tpu.memref_squeeze %117 : memref<1x1x128xf32, #tpu.memory_space<any>> -> memref<128xf32, #tpu.memory_space<any>>
    %c0_i32_58 = arith.constant 0 : i32
    %119 = tpu.memref_slice %arg11[%c2_i32_55, %c0_i32_58] : memref<8x128xf32, #tpu.memory_space<vmem>> -> memref<1x128xf32, #tpu.memory_space<vmem>>
    %120 = tpu.memref_squeeze %119 : memref<1x128xf32, #tpu.memory_space<vmem>> -> memref<128xf32, #tpu.memory_space<vmem>>
    %121 = tpu.memref_slice %arg12[%c2_i32_56] : memref<8x!tpu.dma_semaphore, #tpu.memory_space<semaphore_mem>> -> memref<1x!tpu.dma_semaphore, #tpu.memory_space<semaphore_mem>>
    %122 = tpu.memref_squeeze %121 : memref<1x!tpu.dma_semaphore, #tpu.memory_space<semaphore_mem>> -> memref<!tpu.dma_semaphore, #tpu.memory_space<semaphore_mem>>
    tpu.wait_dma2 semaphore(%122 : memref<!tpu.dma_semaphore, #tpu.memory_space<semaphore_mem>>) src(%118 : memref<128xf32, #tpu.memory_space<any>>) dst(%120 : memref<128xf32, #tpu.memory_space<vmem>>)
    %c3_i32_59 = arith.constant 3 : i32
    %c3_i32_60 = arith.constant 3 : i32
    %c0_i32_61 = arith.constant 0 : i32
    %123 = tpu.memref_slice %arg4[%arg0, %46, %c0_i32_61] : memref<2x64x128xf32, #tpu.memory_space<any>> -> memref<1x1x128xf32, #tpu.memory_space<any>>
    %124 = tpu.memref_squeeze %123 : memref<1x1x128xf32, #tpu.memory_space<any>> -> memref<128xf32, #tpu.memory_space<any>>
    %c0_i32_62 = arith.constant 0 : i32
    %125 = tpu.memref_slice %arg11[%c3_i32_59, %c0_i32_62] : memref<8x128xf32, #tpu.memory_space<vmem>> -> memref<1x128xf32, #tpu.memory_space<vmem>>
    %126 = tpu.memref_squeeze %125 : memref<1x128xf32, #tpu.memory_space<vmem>> -> memref<128xf32, #tpu.memory_space<vmem>>
    %127 = tpu.memref_slice %arg12[%c3_i32_60] : memref<8x!tpu.dma_semaphore, #tpu.memory_space<semaphore_mem>> -> memref<1x!tpu.dma_semaphore, #tpu.memory_space<semaphore_mem>>
    %128 = tpu.memref_squeeze %127 : memref<1x!tpu.dma_semaphore, #tpu.memory_space<semaphore_mem>> -> memref<!tpu.dma_semaphore, #tpu.memory_space<semaphore_mem>>
    tpu.wait_dma2 semaphore(%128 : memref<!tpu.dma_semaphore, #tpu.memory_space<semaphore_mem>>) src(%124 : memref<128xf32, #tpu.memory_space<any>>) dst(%126 : memref<128xf32, #tpu.memory_space<vmem>>)
    %c4_i32_63 = arith.constant 4 : i32
    %c4_i32_64 = arith.constant 4 : i32
    %c0_i32_65 = arith.constant 0 : i32
    %129 = tpu.memref_slice %arg4[%arg0, %59, %c0_i32_65] : memref<2x64x128xf32, #tpu.memory_space<any>> -> memref<1x1x128xf32, #tpu.memory_space<any>>
    %130 = tpu.memref_squeeze %129 : memref<1x1x128xf32, #tpu.memory_space<any>> -> memref<128xf32, #tpu.memory_space<any>>
    %c0_i32_66 = arith.constant 0 : i32
    %131 = tpu.memref_slice %arg11[%c4_i32_63, %c0_i32_66] : memref<8x128xf32, #tpu.memory_space<vmem>> -> memref<1x128xf32, #tpu.memory_space<vmem>>
    %132 = tpu.memref_squeeze %131 : memref<1x128xf32, #tpu.memory_space<vmem>> -> memref<128xf32, #tpu.memory_space<vmem>>
    %133 = tpu.memref_slice %arg12[%c4_i32_64] : memref<8x!tpu.dma_semaphore, #tpu.memory_space<semaphore_mem>> -> memref<1x!tpu.dma_semaphore, #tpu.memory_space<semaphore_mem>>
    %134 = tpu.memref_squeeze %133 : memref<1x!tpu.dma_semaphore, #tpu.memory_space<semaphore_mem>> -> memref<!tpu.dma_semaphore, #tpu.memory_space<semaphore_mem>>
    tpu.wait_dma2 semaphore(%134 : memref<!tpu.dma_semaphore, #tpu.memory_space<semaphore_mem>>) src(%130 : memref<128xf32, #tpu.memory_space<any>>) dst(%132 : memref<128xf32, #tpu.memory_space<vmem>>)
    %c5_i32_67 = arith.constant 5 : i32
    %c5_i32_68 = arith.constant 5 : i32
    %c0_i32_69 = arith.constant 0 : i32
    %135 = tpu.memref_slice %arg4[%arg0, %72, %c0_i32_69] : memref<2x64x128xf32, #tpu.memory_space<any>> -> memref<1x1x128xf32, #tpu.memory_space<any>>
    %136 = tpu.memref_squeeze %135 : memref<1x1x128xf32, #tpu.memory_space<any>> -> memref<128xf32, #tpu.memory_space<any>>
    %c0_i32_70 = arith.constant 0 : i32
    %137 = tpu.memref_slice %arg11[%c5_i32_67, %c0_i32_70] : memref<8x128xf32, #tpu.memory_space<vmem>> -> memref<1x128xf32, #tpu.memory_space<vmem>>
    %138 = tpu.memref_squeeze %137 : memref<1x128xf32, #tpu.memory_space<vmem>> -> memref<128xf32, #tpu.memory_space<vmem>>
    %139 = tpu.memref_slice %arg12[%c5_i32_68] : memref<8x!tpu.dma_semaphore, #tpu.memory_space<semaphore_mem>> -> memref<1x!tpu.dma_semaphore, #tpu.memory_space<semaphore_mem>>
    %140 = tpu.memref_squeeze %139 : memref<1x!tpu.dma_semaphore, #tpu.memory_space<semaphore_mem>> -> memref<!tpu.dma_semaphore, #tpu.memory_space<semaphore_mem>>
    tpu.wait_dma2 semaphore(%140 : memref<!tpu.dma_semaphore, #tpu.memory_space<semaphore_mem>>) src(%136 : memref<128xf32, #tpu.memory_space<any>>) dst(%138 : memref<128xf32, #tpu.memory_space<vmem>>)
    %c6_i32_71 = arith.constant 6 : i32
    %c6_i32_72 = arith.constant 6 : i32
    %c0_i32_73 = arith.constant 0 : i32
    %141 = tpu.memref_slice %arg4[%arg0, %85, %c0_i32_73] : memref<2x64x128xf32, #tpu.memory_space<any>> -> memref<1x1x128xf32, #tpu.memory_space<any>>
    %142 = tpu.memref_squeeze %141 : memref<1x1x128xf32, #tpu.memory_space<any>> -> memref<128xf32, #tpu.memory_space<any>>
    %c0_i32_74 = arith.constant 0 : i32
    %143 = tpu.memref_slice %arg11[%c6_i32_71, %c0_i32_74] : memref<8x128xf32, #tpu.memory_space<vmem>> -> memref<1x128xf32, #tpu.memory_space<vmem>>
    %144 = tpu.memref_squeeze %143 : memref<1x128xf32, #tpu.memory_space<vmem>> -> memref<128xf32, #tpu.memory_space<vmem>>
    %145 = tpu.memref_slice %arg12[%c6_i32_72] : memref<8x!tpu.dma_semaphore, #tpu.memory_space<semaphore_mem>> -> memref<1x!tpu.dma_semaphore, #tpu.memory_space<semaphore_mem>>
    %146 = tpu.memref_squeeze %145 : memref<1x!tpu.dma_semaphore, #tpu.memory_space<semaphore_mem>> -> memref<!tpu.dma_semaphore, #tpu.memory_space<semaphore_mem>>
    tpu.wait_dma2 semaphore(%146 : memref<!tpu.dma_semaphore, #tpu.memory_space<semaphore_mem>>) src(%142 : memref<128xf32, #tpu.memory_space<any>>) dst(%144 : memref<128xf32, #tpu.memory_space<vmem>>)
    %c7_i32_75 = arith.constant 7 : i32
    %c7_i32_76 = arith.constant 7 : i32
    %c0_i32_77 = arith.constant 0 : i32
    %147 = tpu.memref_slice %arg4[%arg0, %98, %c0_i32_77] : memref<2x64x128xf32, #tpu.memory_space<any>> -> memref<1x1x128xf32, #tpu.memory_space<any>>
    %148 = tpu.memref_squeeze %147 : memref<1x1x128xf32, #tpu.memory_space<any>> -> memref<128xf32, #tpu.memory_space<any>>
    %c0_i32_78 = arith.constant 0 : i32
    %149 = tpu.memref_slice %arg11[%c7_i32_75, %c0_i32_78] : memref<8x128xf32, #tpu.memory_space<vmem>> -> memref<1x128xf32, #tpu.memory_space<vmem>>
    %150 = tpu.memref_squeeze %149 : memref<1x128xf32, #tpu.memory_space<vmem>> -> memref<128xf32, #tpu.memory_space<vmem>>
    %151 = tpu.memref_slice %arg12[%c7_i32_76] : memref<8x!tpu.dma_semaphore, #tpu.memory_space<semaphore_mem>> -> memref<1x!tpu.dma_semaphore, #tpu.memory_space<semaphore_mem>>
    %152 = tpu.memref_squeeze %151 : memref<1x!tpu.dma_semaphore, #tpu.memory_space<semaphore_mem>> -> memref<!tpu.dma_semaphore, #tpu.memory_space<semaphore_mem>>
    tpu.wait_dma2 semaphore(%152 : memref<!tpu.dma_semaphore, #tpu.memory_space<semaphore_mem>>) src(%148 : memref<128xf32, #tpu.memory_space<any>>) dst(%150 : memref<128xf32, #tpu.memory_space<vmem>>)
    %c0 = arith.constant 0 : index
    %c0_79 = arith.constant 0 : index
    %153 = vector.load %arg11[%c0, %c0_79] : memref<8x128xf32, #tpu.memory_space<vmem>>, vector<8x128xf32>
    %c0_80 = arith.constant 0 : index
    %c0_81 = arith.constant 0 : index
    %c0_82 = arith.constant 0 : index
    %154 = vector.load %arg6[%c0_80, %c0_81, %c0_82] : memref<1x8x128xf32, #tpu.memory_space<vmem>>, vector<1x8x128xf32>
    %155 = vector.shape_cast %154 : vector<1x8x128xf32> to vector<8x128xf32>
    %156 = arith.addf %153, %155 : vector<8x128xf32>
    %c0_83 = arith.constant 0 : index
    %c0_84 = arith.constant 0 : index
    %c0_85 = arith.constant 0 : index
    %c0_86 = arith.constant 0 : index
    %157 = vector.load %arg5[%c0_83, %c0_84, %c0_85, %c0_86] : memref<1x1x8x1xi32, #tpu.memory_space<vmem>>, vector<1x1x8x1xi32>
    %158 = vector.shape_cast %157 : vector<1x1x8x1xi32> to vector<8x1xi32>
    %c0_i32_87 = arith.constant 0 : i32
    %159 = vector.broadcast %c0_i32_87 : i32 to vector<8x1xi32>
    %160 = arith.cmpi eq, %158, %159 : vector<8x1xi32>
    %161 = arith.extui %160 : vector<8x1xi1> to vector<8x1xi32>
    %162 = arith.sitofp %161 : vector<8x1xi32> to vector<8x1xf32>
    %c0_88 = arith.constant 0 : index
    %c0_89 = arith.constant 0 : index
    %c0_90 = arith.constant 0 : index
    %163 = vector.load %arg7[%c0_88, %c0_89, %c0_90] : memref<1x3x128xf32, #tpu.memory_space<vmem>>, vector<1x1x128xf32>
    %164 = vector.shape_cast %163 : vector<1x1x128xf32> to vector<1x128xf32>
    %165 = vector.broadcast %162 : vector<8x1xf32> to vector<8x128xf32>
    %166 = vector.broadcast %164 : vector<1x128xf32> to vector<8x128xf32>
    %167 = arith.mulf %165, %166 : vector<8x128xf32>
    %168 = arith.addf %156, %167 : vector<8x128xf32>
    %c1_i32_91 = arith.constant 1 : i32
    %169 = vector.broadcast %c1_i32_91 : i32 to vector<8x1xi32>
    %170 = arith.cmpi eq, %158, %169 : vector<8x1xi32>
    %171 = arith.extui %170 : vector<8x1xi1> to vector<8x1xi32>
    %172 = arith.sitofp %171 : vector<8x1xi32> to vector<8x1xf32>
    %c0_92 = arith.constant 0 : index
    %c1 = arith.constant 1 : index
    %c0_93 = arith.constant 0 : index
    %173 = vector.load %arg7[%c0_92, %c1, %c0_93] : memref<1x3x128xf32, #tpu.memory_space<vmem>>, vector<1x1x128xf32>
    %174 = vector.shape_cast %173 : vector<1x1x128xf32> to vector<1x128xf32>
    %175 = vector.broadcast %172 : vector<8x1xf32> to vector<8x128xf32>
    %176 = vector.broadcast %174 : vector<1x128xf32> to vector<8x128xf32>
    %177 = arith.mulf %175, %176 : vector<8x128xf32>
    %178 = arith.addf %168, %177 : vector<8x128xf32>
    %c2_i32_94 = arith.constant 2 : i32
    %179 = vector.broadcast %c2_i32_94 : i32 to vector<8x1xi32>
    %180 = arith.cmpi eq, %158, %179 : vector<8x1xi32>
    %181 = arith.extui %180 : vector<8x1xi1> to vector<8x1xi32>
    %182 = arith.sitofp %181 : vector<8x1xi32> to vector<8x1xf32>
    %c0_95 = arith.constant 0 : index
    %c2 = arith.constant 2 : index
    %c0_96 = arith.constant 0 : index
    %183 = vector.load %arg7[%c0_95, %c2, %c0_96] : memref<1x3x128xf32, #tpu.memory_space<vmem>>, vector<1x1x128xf32>
    %184 = vector.shape_cast %183 : vector<1x1x128xf32> to vector<1x128xf32>
    %185 = vector.broadcast %182 : vector<8x1xf32> to vector<8x128xf32>
    %186 = vector.broadcast %184 : vector<1x128xf32> to vector<8x128xf32>
    %187 = arith.mulf %185, %186 : vector<8x128xf32>
    %188 = arith.addf %178, %187 : vector<8x128xf32>
    %cst = arith.constant dense<0.000000e+00> : vector<8xf32>
    %189 = vector.multi_reduction <add>, %188, %cst [1] : vector<8x128xf32> to vector<8xf32>
    %190 = vector.shape_cast %189 : vector<8xf32> to vector<8x1xf32>
    %191 = arith.mulf %188, %188 : vector<8x128xf32>
    %cst_97 = arith.constant dense<0.000000e+00> : vector<8xf32>
    %192 = vector.multi_reduction <add>, %191, %cst_97 [1] : vector<8x128xf32> to vector<8xf32>
    %193 = vector.shape_cast %192 : vector<8xf32> to vector<8x1xf32>
    %cst_98 = arith.constant 7.812500e-03 : f32
    %194 = vector.broadcast %cst_98 : f32 to vector<8x1xf32>
    %195 = arith.mulf %190, %194 : vector<8x1xf32>
    %cst_99 = arith.constant 7.812500e-03 : f32
    %196 = vector.broadcast %cst_99 : f32 to vector<8x1xf32>
    %197 = arith.mulf %193, %196 : vector<8x1xf32>
    %198 = arith.mulf %195, %195 : vector<8x1xf32>
    %199 = arith.subf %197, %198 : vector<8x1xf32>
    %cst_100 = arith.constant 9.99999997E-7 : f32
    %200 = vector.broadcast %cst_100 : f32 to vector<8x1xf32>
    %201 = arith.addf %199, %200 : vector<8x1xf32>
    %202 = math.rsqrt %201 : vector<8x1xf32>
    %203 = vector.broadcast %195 : vector<8x1xf32> to vector<8x128xf32>
    %204 = arith.subf %188, %203 : vector<8x128xf32>
    %205 = vector.broadcast %202 : vector<8x1xf32> to vector<8x128xf32>
    %206 = arith.mulf %204, %205 : vector<8x128xf32>
    %c0_101 = arith.constant 0 : index
    %c0_102 = arith.constant 0 : index
    %c0_103 = arith.constant 0 : index
    %207 = vector.load %arg8[%c0_101, %c0_102, %c0_103] : memref<1x1x128xf32, #tpu.memory_space<vmem>>, vector<1x1x128xf32>
    %208 = vector.shape_cast %207 : vector<1x1x128xf32> to vector<1x128xf32>
    %209 = vector.broadcast %208 : vector<1x128xf32> to vector<8x128xf32>
    %210 = arith.mulf %206, %209 : vector<8x128xf32>
    %c0_104 = arith.constant 0 : index
    %c0_105 = arith.constant 0 : index
    %c0_106 = arith.constant 0 : index
    %211 = vector.load %arg9[%c0_104, %c0_105, %c0_106] : memref<1x1x128xf32, #tpu.memory_space<vmem>>, vector<1x1x128xf32>
    %212 = vector.shape_cast %211 : vector<1x1x128xf32> to vector<1x128xf32>
    %213 = vector.broadcast %212 : vector<1x128xf32> to vector<8x128xf32>
    %214 = arith.addf %210, %213 : vector<8x128xf32>
    %c0_107 = arith.constant 0 : index
    %c0_108 = arith.constant 0 : index
    %c0_109 = arith.constant 0 : index
    %c0_110 = arith.constant 0 : index
    %215 = vector.load %arg10[%c0_107, %c0_108, %c0_109, %c0_110] : memref<1x1x8x128xf32, #tpu.memory_space<vmem>>, vector<1x1x8x128xf32>
    %216 = vector.shape_cast %215 : vector<1x1x8x128xf32> to vector<8x128xf32>
    %217 = vector.shape_cast %214 : vector<8x128xf32> to vector<1x1x8x128xf32>
    tpu.vector_store %arg10[%c0_107, %c0_108, %c0_109, %c0_110], %217 {strides = array<i32>} : memref<1x1x8x128xf32, #tpu.memory_space<vmem>>, vector<1x1x8x128xf32>,
    return
  }
  func.func @transform_1(%arg0: i32, %arg1: i32, %arg2: i32, %arg3: memref<2x2x8xi32, #tpu.memory_space<smem>>) -> (i32, i32, i32, i32) {
    %c0_i32 = arith.constant 0 : i32
    %c0_i32_0 = arith.constant 0 : i32
    return %arg0, %arg1, %arg2, %c0_i32 : i32, i32, i32, i32
  }
  func.func @transform_2(%arg0: i32, %arg1: i32, %arg2: i32, %arg3: memref<2x2x8xi32, #tpu.memory_space<smem>>) -> (i32, i32, i32) {
    %c0_i32 = arith.constant 0 : i32
    %c0_i32_0 = arith.constant 0 : i32
    return %arg0, %arg2, %c0_i32 : i32, i32, i32
  }
  func.func @transform_3(%arg0: i32, %arg1: i32, %arg2: i32, %arg3: memref<2x2x8xi32, #tpu.memory_space<smem>>) -> (i32, i32, i32) {
    %c0_i32 = arith.constant 0 : i32
    %c0_i32_0 = arith.constant 0 : i32
    %c0_i32_1 = arith.constant 0 : i32
    return %arg0, %c0_i32, %c0_i32_0 : i32, i32, i32
  }
  func.func @transform_4(%arg0: i32, %arg1: i32, %arg2: i32, %arg3: memref<2x2x8xi32, #tpu.memory_space<smem>>) -> (i32, i32, i32) {
    %c0_i32 = arith.constant 0 : i32
    %c0_i32_0 = arith.constant 0 : i32
    %c0_i32_1 = arith.constant 0 : i32
    return %arg0, %c0_i32, %c0_i32_0 : i32, i32, i32
  }
  func.func @transform_5(%arg0: i32, %arg1: i32, %arg2: i32, %arg3: memref<2x2x8xi32, #tpu.memory_space<smem>>) -> (i32, i32, i32) {
    %c0_i32 = arith.constant 0 : i32
    %c0_i32_0 = arith.constant 0 : i32
    %c0_i32_1 = arith.constant 0 : i32
    return %arg0, %c0_i32, %c0_i32_0 : i32, i32, i32
  }
  func.func @transform_6(%arg0: i32, %arg1: i32, %arg2: i32, %arg3: memref<2x2x8xi32, #tpu.memory_space<smem>>) -> (i32, i32, i32, i32) {
    %c0_i32 = arith.constant 0 : i32
    %c0_i32_0 = arith.constant 0 : i32
    return %arg0, %arg1, %arg2, %c0_i32 : i32, i32, i32, i32
  }
}

</mosaic_0001>

<llo_original>
// kernel: tpu_custom_call.1
$region0: #{tpu_custom_call.1}
  #allocation0 [shape = 'u32[]', space=smem, size = 0x4, offset = 0x4, fixed_abs, tag = 'smem constant byte address 0x4 - core index']
  #allocation1 [shape = 'u32[144,128]{1,0:T(1,128)}', space=vmem, size = 0x12000, scoped, tag = 'internal scratch']
  #allocation2 [shape = 'f32[8,128]{1,0:T(8,128)}', space=vmem, size = 0x1000, scoped, tag = 'scratch operand']
  #allocation3 [shape = 's32[8]{0}', space=sflag, size = 0x20, scoped, tag = 'scratch operand']
  #allocation4 [shape = 's32[1]{0}', space=sflag, size = 0x4, scoped, tag = 'scoped memory for tpu_custom_call.1']
  #allocation5 [shape = 'u8[2048]{0}', space=smem, size = 0x800, scoped, tag = 'prefetched SMEM operand 0']
  #allocation8 [shape = 's32[]', space=sflag, size = 0x4, offset = 0, fixed_abs, tag = 'sflag constant byte address 0x0 - dummy sync flag']
  #allocation9 [shape = 's32[]', space=sflag, size = 0x4, offset = 0, fixed_abs, tag = 'sflag constant byte address 0x0 - dummy sync flag']
  #allocation10 [shape = 'u32[]', space=smem, size = 0x4, offset = 0x44, fixed_abs, tag = 'smem constant byte address 0x44 - assertion arg 0']
  #allocation11 [shape = 'u32[]', space=smem, size = 0x4, offset = 0x48, fixed_abs, tag = 'smem constant byte address 0x48 - assertion arg 1']
  #allocation12 [shape = 's32[]', space=sflag, size = 0x4, offset = 0, fixed_abs, tag = 'sflag constant byte address 0x0 - dummy sync flag']
  #allocation13 [shape = 's32[]', space=sflag, size = 0x4, offset = 0, fixed_abs, tag = 'sflag constant byte address 0x0 - dummy sync flag']
  #allocation14 [shape = 's32[]', space=sflag, size = 0x4, offset = 0, fixed_abs, tag = 'sflag constant byte address 0x0 - dummy sync flag']
  #allocation15 [shape = 's32[]', space=sflag, size = 0x4, offset = 0, fixed_abs, tag = 'sflag constant byte address 0x0 - dummy sync flag']
  #allocation16 [shape = 's32[]', space=sflag, size = 0x4, offset = 0, fixed_abs, tag = 'sflag constant byte address 0x0 - dummy sync flag']
  #allocation17 [shape = 's32[]', space=sflag, size = 0x4, offset = 0, fixed_abs, tag = 'sflag constant byte address 0x0 - dummy sync flag']
  #allocation18 [shape = 's32[]', space=sflag, size = 0x4, offset = 0, fixed_abs, tag = 'sflag constant byte address 0x0 - dummy sync flag']
  #allocation19 [shape = 's32[]', space=sflag, size = 0x4, offset = 0, fixed_abs, tag = 'sflag constant byte address 0x0 - dummy sync flag']
  #allocation20 [shape = 's32[]', space=sflag, size = 0x4, offset = 0, fixed_abs, tag = 'sflag constant byte address 0x0 - dummy sync flag']
  #allocation21 [shape = 's32[]', space=sflag, size = 0x4, offset = 0, fixed_abs, tag = 'sflag constant byte address 0x0 - dummy sync flag']
  #allocation22 [shape = 's32[]', space=sflag, size = 0x4, offset = 0, fixed_abs, tag = 'sflag constant byte address 0x0 - dummy sync flag']
  #allocation23 [shape = 's32[]', space=sflag, size = 0x4, offset = 0, fixed_abs, tag = 'sflag constant byte address 0x0 - dummy sync flag']
  #allocation24 [shape = 's32[]', space=sflag, size = 0x4, offset = 0, fixed_abs, tag = 'sflag constant byte address 0x0 - dummy sync flag']
  #allocation25 [shape = 's32[]', space=sflag, size = 0x4, offset = 0, fixed_abs, tag = 'sflag constant byte address 0x0 - dummy sync flag']
  %s0 = inlined_call_operand.vmem [shape: s32[2,2,8], index: 0, kind: input, shape index: {}]
  %s1 = inlined_call_operand.hbm [shape: f32[2,64,128], index: 1, kind: input, shape index: {}]
  %s2 = inlined_call_operand.vmem [shape: s32[2,2,8,1], index: 2, kind: input, shape index: {}]
  %s3 = inlined_call_operand.vmem [shape: f32[2,16,128], index: 3, kind: input, shape index: {}]
  %s4 = inlined_call_operand.vmem [shape: f32[2,3,128], index: 4, kind: input, shape index: {}]
  %s5 = inlined_call_operand.vmem [shape: f32[2,1,128], index: 5, kind: input, shape index: {}]
  %s6 = inlined_call_operand.vmem [shape: f32[2,1,128], index: 6, kind: input, shape index: {}]
  %s7 = inlined_call_operand.hbm [shape: f32[2,2,8,128], index: 7, kind: output, shape index: {}]
  %s8 = sld [smem:[#allocation0]]
  $region85: #{tpu_custom_call.1} parent=0
    _
  %s10 = ssub.s32 1, %s8
  %s11 = scalar_select 0, %s10, %s8
  %s12 = sshll.u32 %s0, 4
  %s13 = int_to_ptr.vmem [resolvable:$true] %s12
  %15 = dma.vmem_to_smem %s13, 64, [#allocation5], [#allocation4]
  %16 = dma.done [#allocation4], 64
  %17 = sfence
  $region1: #{tpu_custom_call.1} parent=0
    #allocation6 [shape = 'u8[8192]{0}', space=vmem, size = 0x2000, scoped, tag = 'output window, operand 0']
    #allocation7 [shape = 's32[2]{0}', space=sflag, size = 0x8, scoped, tag = 'scoped memory for tpu_custom_call.1']
    %18 = vsyncpa [#allocation7], 0
    %s19 = scalar_lea.sflag [#allocation7], 1
    %20 = vsyncpa %s19, 0
    loop: start=0, step=1, limit=6
    $region2: #{tpu_custom_call.1} parent=1 // loop_pre_header
      _
    $region3: #{tpu_custom_call.1} parent=1 // loop_header
      %s22 = sphi 0, %s26
      %p23 = scmp.ge.s32.totalorder %s22, 6
      %s29 = sphi 0, %s48
      %s30 = sphi 0, %s44
      %s31 = sphi 0, %s40
      %s32 = sphi 0, %s29
      %s33 = sphi 0, %s30
      %s34 = sphi 0, %s31
      %s35 = sphi 0, %s32
      %s36 = sphi 0, %s33
      %s37 = sphi 0, %s34
      %s55 = sphi 0, %s57
      %s58 = sphi 0, %s55
      %s59 = sphi 0, %s58
      %s75 = sphi 0, %s59
      %s83 = sphi 0, %s85
      %s86 = sphi 0, %s83
      %s87 = sphi 0, %s86
      %s103 = sphi 0, %s87
      %s109 = sphi 0, %s111
      %s112 = sphi 0, %s109
      %s113 = sphi 0, %s112
      %s129 = sphi 0, %s113
      %s135 = sphi 0, %s137
      %s138 = sphi 0, %s135
      %s139 = sphi 0, %s138
      %s155 = sphi 0, %s139
      %s161 = sphi 0, %s163
      %s164 = sphi 0, %s161
      %s165 = sphi 0, %s164
      %s181 = sphi 0, %s165
      %s191 = sphi 0, %s193
      %s194 = sphi 0, %s191
      %s195 = sphi 0, %s194
      %s211 = sphi 0, %s195
    $region4: #{tpu_custom_call.1} parent=1 // loop_header_branch
      %25 = sbr.rel (%p23) target = $region8
    $region5: #{tpu_custom_call.1} parent=1 // loop_body
      %s27 = ssub.s32 %s22, 1
      %s28 = ssub.s32 %s22, 2
      %s38 = sadd.s32 1, %s31
      %p39 = scmp.ge.s32.totalorder %s38, 1
      %s40 = scalar_select %p39, 0, %s38
      %s41 = sadd.s32 1, %s30
      %s42 = scalar_select %p39, %s41, %s30
      %p43 = scmp.ge.s32.totalorder %s42, 2
      %s44 = scalar_select %p43, 0, %s42
      %s45 = sadd.s32 1, %s29
      %s46 = scalar_select %p43, %s45, %s29
      %p47 = scmp.ge.s32.totalorder %s46, 2
      %s48 = scalar_select %p47, 0, %s46
      %s49 = ssub.s32 %s29, %s48
      %s50 = ssub.s32 %s30, %s44
      %s51 = sor.u32 %s49, %s50
      %s52 = ssub.s32 %s31, %s40
      %s53 = sor.u32 %s51, %s52
      %p54 = scmp.eq.s32.totalorder %s53, 0
      %s56 = sadd.s32 %s55, 1
      %s57 = scalar_select %p54, %s55, %s56
      %p60 = pneg %p54
      %p61 = scmp.eq.s32.totalorder %s22, 3
      %p62 = por %p60, %p61
      %p63 = scmp.ne.s32.totalorder %s55, %s58
      %p64 = scmp.eq.s32.totalorder %s22, 0
      %p65 = por %p63, %p64
      %p66 = scmp.ne.s32.totalorder %s55, %s58
      %p67 = scmp.eq.s32.totalorder %s27, 3
      %p68 = por %p66, %p67
      %p69 = scmp.ne.s32.totalorder %s58, %s59
      %p70 = scmp.eq.s32.totalorder %s27, 0
      %p71 = por %p69, %p70
      %p72 = scmp.ne.s32.totalorder %s58, %s59
      %p73 = scmp.eq.s32.totalorder %s28, 3
      %p74 = por %p72, %p73
      %p76 = scmp.ne.s32.totalorder %s59, %s75
      %p77 = scmp.eq.s32.totalorder %s28, 0
      %p78 = por %p76, %p77
      %s79 = ssub.s32 %s29, %s48
      %s80 = ssub.s32 %s31, %s40
      %s81 = sor.u32 %s79, %s80
      %p82 = scmp.eq.s32.totalorder %s81, 0
      %s84 = sadd.s32 %s83, 1
      %s85 = scalar_select %p82, %s83, %s84
      %p88 = pneg %p82
      %p89 = scmp.eq.s32.totalorder %s22, 3
      %p90 = por %p88, %p89
      %p91 = scmp.ne.s32.totalorder %s83, %s86
      %p92 = scmp.eq.s32.totalorder %s22, 0
      %p93 = por %p91, %p92
      %p94 = scmp.ne.s32.totalorder %s83, %s86
      %p95 = scmp.eq.s32.totalorder %s27, 3
      %p96 = por %p94, %p95
      %p97 = scmp.ne.s32.totalorder %s86, %s87
      %p98 = scmp.eq.s32.totalorder %s27, 0
      %p99 = por %p97, %p98
      %p100 = scmp.ne.s32.totalorder %s86, %s87
      %p101 = scmp.eq.s32.totalorder %s28, 3
      %p102 = por %p100, %p101
      %p104 = scmp.ne.s32.totalorder %s87, %s103
      %p105 = scmp.eq.s32.totalorder %s28, 0
      %p106 = por %p104, %p105
      %s107 = ssub.s32 %s29, %s48
      %p108 = scmp.eq.s32.totalorder %s107, 0
      %s110 = sadd.s32 %s109, 1
      %s111 = scalar_select %p108, %s109, %s110
      %p114 = pneg %p108
      %p115 = scmp.eq.s32.totalorder %s22, 3
      %p116 = por %p114, %p115
      %p117 = scmp.ne.s32.totalorder %s109, %s112
      %p118 = scmp.eq.s32.totalorder %s22, 0
      %p119 = por %p117, %p118
      %p120 = scmp.ne.s32.totalorder %s109, %s112
      %p121 = scmp.eq.s32.totalorder %s27, 3
      %p122 = por %p120, %p121
      %p123 = scmp.ne.s32.totalorder %s112, %s113
      %p124 = scmp.eq.s32.totalorder %s27, 0
      %p125 = por %p123, %p124
      %p126 = scmp.ne.s32.totalorder %s112, %s113
      %p127 = scmp.eq.s32.totalorder %s28, 3
      %p128 = por %p126, %p127
      %p130 = scmp.ne.s32.totalorder %s113, %s129
      %p131 = scmp.eq.s32.totalorder %s28, 0
      %p132 = por %p130, %p131
      %s133 = ssub.s32 %s29, %s48
      %p134 = scmp.eq.s32.totalorder %s133, 0
      %s136 = sadd.s32 %s135, 1
      %s137 = scalar_select %p134, %s135, %s136
      %p140 = pneg %p134
      %p141 = scmp.eq.s32.totalorder %s22, 3
      %p142 = por %p140, %p141
      %p143 = scmp.ne.s32.totalorder %s135, %s138
      %p144 = scmp.eq.s32.totalorder %s22, 0
      %p145 = por %p143, %p144
      %p146 = scmp.ne.s32.totalorder %s135, %s138
      %p147 = scmp.eq.s32.totalorder %s27, 3
      %p148 = por %p146, %p147
      %p149 = scmp.ne.s32.totalorder %s138, %s139
      %p150 = scmp.eq.s32.totalorder %s27, 0
      %p151 = por %p149, %p150
      %p152 = scmp.ne.s32.totalorder %s138, %s139
      %p153 = scmp.eq.s32.totalorder %s28, 3
      %p154 = por %p152, %p153
      %p156 = scmp.ne.s32.totalorder %s139, %s155
      %p157 = scmp.eq.s32.totalorder %s28, 0
      %p158 = por %p156, %p157
      %s159 = ssub.s32 %s29, %s48
      %p160 = scmp.eq.s32.totalorder %s159, 0
      %s162 = sadd.s32 %s161, 1
      %s163 = scalar_select %p160, %s161, %s162
      %p166 = pneg %p160
      %p167 = scmp.eq.s32.totalorder %s22, 3
      %p168 = por %p166, %p167
      %p169 = scmp.ne.s32.totalorder %s161, %s164
      %p170 = scmp.eq.s32.totalorder %s22, 0
      %p171 = por %p169, %p170
      %p172 = scmp.ne.s32.totalorder %s161, %s164
      %p173 = scmp.eq.s32.totalorder %s27, 3
      %p174 = por %p172, %p173
      %p175 = scmp.ne.s32.totalorder %s164, %s165
      %p176 = scmp.eq.s32.totalorder %s27, 0
      %p177 = por %p175, %p176
      %p178 = scmp.ne.s32.totalorder %s164, %s165
      %p179 = scmp.eq.s32.totalorder %s28, 3
      %p180 = por %p178, %p179
      %p182 = scmp.ne.s32.totalorder %s165, %s181
      %p183 = scmp.eq.s32.totalorder %s28, 0
      %p184 = por %p182, %p183
      %s185 = ssub.s32 %s29, %s48
      %s186 = ssub.s32 %s30, %s44
      %s187 = sor.u32 %s185, %s186
      %s188 = ssub.s32 %s31, %s40
      %s189 = sor.u32 %s187, %s188
      %p190 = scmp.eq.s32.totalorder %s189, 0
      %s192 = sadd.s32 %s191, 1
      %s193 = scalar_select %p190, %s191, %s192
      %p196 = pneg %p190
      %p197 = scmp.eq.s32.totalorder %s22, 3
      %p198 = por %p196, %p197
      %p199 = scmp.ne.s32.totalorder %s191, %s194
      %p200 = scmp.eq.s32.totalorder %s22, 0
      %p201 = por %p199, %p200
      %p202 = scmp.ne.s32.totalorder %s191, %s194
      %p203 = scmp.eq.s32.totalorder %s27, 3
      %p204 = por %p202, %p203
      %p205 = scmp.ne.s32.totalorder %s194, %s195
      %p206 = scmp.eq.s32.totalorder %s27, 0
      %p207 = por %p205, %p206
      %p208 = scmp.ne.s32.totalorder %s194, %s195
      %p209 = scmp.eq.s32.totalorder %s28, 3
      %p210 = por %p208, %p209
      %p212 = scmp.ne.s32.totalorder %s195, %s211
      %p213 = scmp.eq.s32.totalorder %s28, 0
      %p214 = por %p212, %p213
      %p215 = scmp.le.s32.totalorder 1, %s22
      %p216 = scmp.lt.s32.totalorder %s22, 5
      %p217 = pnand %p215, %p216
      %p218 = pneg %p217
      // Predicated region
      $region9: #{tpu_custom_call.1} parent=5 // pred_check
        _
      $region10: #{tpu_custom_call.1} parent=5 // pred_check_branch
        %220 = sbr.rel (%p217) target = $region12
      $region11: #{tpu_custom_call.1} parent=5 // pred_region
        %s221 = ssub.s32 %s22, 1
      $region12: #{tpu_custom_call.1} parent=5 // pred_fallthru
        _
      %p222 = scmp.lt.s32.totalorder %s22, 4
      // Predicated region
      $region13: #{tpu_custom_call.1} parent=5 // pred_check
        %p223 = pneg %p222
      $region14: #{tpu_custom_call.1} parent=5 // pred_check_branch
        %225 = sbr.rel (%p223) target = $region16
      $region15: #{tpu_custom_call.1} parent=5 // pred_region
        // Predicated region
        $region17: #{tpu_custom_call.1} parent=15 // pred_check
          %p226 = pneg %p65
        $region18: #{tpu_custom_call.1} parent=15 // pred_check_branch
          %228 = sbr.rel (%p226) target = $region20
        $region19: #{tpu_custom_call.1} parent=15 // pred_region
          %p229 = scmp.lt.s32.totalorder %s29, 1
          %s230 = scalar_select %p229, %s29, 1
          %p231 = scmp.lt.s32.totalorder %s30, 1
          %s232 = scalar_select %p231, %s30, 1
          %p233 = scmp.lt.s32.totalorder %s31, 0
          %s234 = scalar_select %p233, %s31, 0
          %s235 = sadd.s32 %s234, %s232
          %s236 = smul.addr %s230, 2
          %s237 = sadd.s32 %s235, %s236
          %s238 = smul.addr %s237, 8
          %s239 = scalar_lea.vmem %s2, %s238
        $region20: #{tpu_custom_call.1} parent=15 // pred_fallthru
          _
        // Predicated region
        $region21: #{tpu_custom_call.1} parent=15 // pred_check
          %p240 = pneg %p93
        $region22: #{tpu_custom_call.1} parent=15 // pred_check_branch
          %242 = sbr.rel (%p240) target = $region24
        $region23: #{tpu_custom_call.1} parent=15 // pred_region
          %p243 = scmp.lt.s32.totalorder %s29, 1
          %s244 = scalar_select %p243, %s29, 1
          %p245 = scmp.lt.s32.totalorder %s31, 1
          %s246 = scalar_select %p245, %s31, 1
          %s247 = smul.addr %s244, 2
          %s248 = sadd.s32 %s246, %s247
          %s249 = smul.addr %s248, 8
          %s250 = scalar_lea.vmem %s3, %s249
        $region24: #{tpu_custom_call.1} parent=15 // pred_fallthru
          _
        // Predicated region
        $region25: #{tpu_custom_call.1} parent=15 // pred_check
          %p251 = pneg %p119
        $region26: #{tpu_custom_call.1} parent=15 // pred_check_branch
          %253 = sbr.rel (%p251) target = $region28
        $region27: #{tpu_custom_call.1} parent=15 // pred_region
          %p254 = scmp.lt.s32.totalorder %s29, 1
          %s255 = scalar_select %p254, %s29, 1
          %s256 = smul.addr %s255, 4
          %s257 = scalar_lea.vmem %s4, %s256
        $region28: #{tpu_custom_call.1} parent=15 // pred_fallthru
          _
        // Predicated region
        $region29: #{tpu_custom_call.1} parent=15 // pred_check
          %p258 = pneg %p145
        $region30: #{tpu_custom_call.1} parent=15 // pred_check_branch
          %260 = sbr.rel (%p258) target = $region32
        $region31: #{tpu_custom_call.1} parent=15 // pred_region
          %p261 = scmp.lt.s32.totalorder %s29, 1
          %s262 = scalar_select %p261, %s29, 1
          %s263 = scalar_lea.vmem %s5, %s262
        $region32: #{tpu_custom_call.1} parent=15 // pred_fallthru
          _
        // Predicated region
        $region33: #{tpu_custom_call.1} parent=15 // pred_check
          %p264 = pneg %p171
        $region34: #{tpu_custom_call.1} parent=15 // pred_check_branch
          %266 = sbr.rel (%p264) target = $region36
        $region35: #{tpu_custom_call.1} parent=15 // pred_region
          %p267 = scmp.lt.s32.totalorder %s29, 1
          %s268 = scalar_select %p267, %s29, 1
          %s269 = scalar_lea.vmem %s6, %s268
        $region36: #{tpu_custom_call.1} parent=15 // pred_fallthru
          _
      $region16: #{tpu_custom_call.1} parent=5 // pred_fallthru
        _
      %p270 = scmp.le.s32.totalorder 1, %s22
      %p271 = scmp.lt.s32.totalorder %s22, 5
      %p272 = pnand %p270, %p271
      %p273 = pneg %p272
      // Predicated region
      $region37: #{tpu_custom_call.1} parent=5 // pred_check
        _
      $region38: #{tpu_custom_call.1} parent=5 // pred_check_branch
        %275 = sbr.rel (%p272) target = $region40
      $region39: #{tpu_custom_call.1} parent=5 // pred_region
        %s276 = ssub.s32 %s22, 1
        %p277 = scmp.lt.s32.totalorder %s32, 1
        %s278 = scalar_select %p277, %s32, 1
        %p279 = scmp.lt.s32.totalorder %s33, 1
        %s280 = scalar_select %p279, %s33, 1
        %p281 = scmp.lt.s32.totalorder %s34, 0
        %s282 = scalar_select %p281, %s34, 0
        %s283 = sadd.s32 %s282, %s280
        %s284 = smul.addr %s278, 2
        %s285 = sadd.s32 %s283, %s284
        %s286 = smul.addr %s285, 8
        %s287 = scalar_lea.vmem %s2, %s286
        %p288 = pneg %p71
        %p289 = pneg %p68
        %p290 = scmp.lt.s32.totalorder %s32, 1
        %s291 = scalar_select %p290, %s32, 1
        %p292 = scmp.lt.s32.totalorder %s34, 1
        %s293 = scalar_select %p292, %s34, 1
        %s294 = smul.addr %s291, 2
        %s295 = sadd.s32 %s293, %s294
        %s296 = smul.addr %s295, 8
        %s297 = scalar_lea.vmem %s3, %s296
        %p298 = pneg %p99
        %p299 = pneg %p96
        %p300 = scmp.lt.s32.totalorder %s32, 1
        %s301 = scalar_select %p300, %s32, 1
        %s302 = smul.addr %s301, 4
        %s303 = scalar_lea.vmem %s4, %s302
        %p304 = pneg %p125
        %p305 = pneg %p122
        %p306 = scmp.lt.s32.totalorder %s32, 1
        %s307 = scalar_select %p306, %s32, 1
        %s308 = scalar_lea.vmem %s5, %s307
        %p309 = pneg %p151
        %p310 = pneg %p148
        %p311 = scmp.lt.s32.totalorder %s32, 1
        %s312 = scalar_select %p311, %s32, 1
        %s313 = scalar_lea.vmem %s6, %s312
        %p314 = pneg %p177
        %p315 = pneg %p174
        %p316 = pneg %p207
        %p317 = pneg %p204
        %s318 = sand.u32 %s194, 1
        %s319 = scalar_lea.sflag [#allocation7], %s318
        %s320 = sand.u32 %s194, 1
        %s321 = smul.addr %s320, 8
        %s322 = scalar_lea.vmem [#allocation6], %s321
        %p323 = scmp.lt.s32.totalorder %s32, 1
        %s324 = scalar_select %p323, %s32, 1
        %p325 = scmp.lt.s32.totalorder %s33, 1
        %s326 = scalar_select %p325, %s33, 1
        %p327 = scmp.lt.s32.totalorder %s34, 0
        %s328 = scalar_select %p327, %s34, 0
        %s329 = sadd.s32 %s328, %s326
        %s330 = smul.addr %s324, 2
        %s331 = sadd.s32 %s329, %s330
        %s332 = smul.addr %s331, 8
        %s333 = scalar_lea.vmem %s2, %s332
        %p334 = scmp.lt.s32.totalorder %s32, 1
        %s335 = scalar_select %p334, %s32, 1
        %p336 = scmp.lt.s32.totalorder %s34, 1
        %s337 = scalar_select %p336, %s34, 1
        %s338 = smul.addr %s335, 2
        %s339 = sadd.s32 %s337, %s338
        %s340 = smul.addr %s339, 8
        %s341 = scalar_lea.vmem %s3, %s340
        %p342 = scmp.lt.s32.totalorder %s32, 1
        %s343 = scalar_select %p342, %s32, 1
        %s344 = smul.addr %s343, 4
        %s345 = scalar_lea.vmem %s4, %s344
        %p346 = scmp.lt.s32.totalorder %s32, 1
        %s347 = scalar_select %p346, %s32, 1
        %s348 = scalar_lea.vmem %s5, %s347
        %p349 = scmp.lt.s32.totalorder %s32, 1
        %s350 = scalar_select %p349, %s32, 1
        %s351 = scalar_lea.vmem %s6, %s350
        %s352 = smul.u32 %s34, 8
        %s353 = sshra.s32 %s352, 7
        %s354 = sand.u32 %s352, 127
        %s355 = sadd.s32 %s353, %s33
        %s356 = smul.u32 %s32, 2
        %s357 = sadd.s32 %s355, %s356
        %s358 = smul.u32 %s357, 128
        %s359 = sshra.s32 %s352, 7
        %s360 = sand.u32 %s352, 127
        %s361 = sadd.s32 %s358, %s360
        %s362 = sld [smem:[#allocation5 + %s361]]
        %p363 = scmp.gt.s32.totalorder %s362, 0
        %s364 = scalar_select %p363, %s362, 0
        %p365 = scmp.lt.s32.totalorder %s364, 63
        %s366 = scalar_select %p365, %s364, 63
        %s367 = smul.u32 %s32, 64
        %s368 = sadd.s32 %s366, %s367
        %s369 = smul.addr %s368, 16
        %s370 = scalar_lea.hbm %s1, %s369
        // Predicated region
        $region41: #{tpu_custom_call.1} parent=39 // pred_check
          _
        $region42: #{tpu_custom_call.1} parent=39 // pred_check_branch
          %372 = sbr.rel target = $region44
        $region43: #{tpu_custom_call.1} parent=39 // pred_region
          %373 = sst [smem:[#allocation10]] [#allocation9]
          %374 = sst [smem:[#allocation11]] [#allocation8]
        $region44: #{tpu_custom_call.1} parent=39 // pred_fallthru
          _
        %376 = shalt.err (0)
        %s378 = sshll.u32 [#allocation2], 4
        %s379 = int_to_ptr.vmem [resolvable:$true] %s378
        %381 = dma.hbm_to_vmem [thread:$0]  %s370, 16, %s379, [#allocation3]
        %s382 = sadd.s32 %s352, 1
        %s383 = sshra.s32 %s382, 7
        %s384 = sand.u32 %s382, 127
        %s385 = sadd.s32 %s383, %s33
        %s386 = sadd.s32 %s385, %s356
        %s387 = smul.u32 %s386, 128
        %s388 = sshra.s32 %s382, 7
        %s389 = sand.u32 %s382, 127
        %s390 = sadd.s32 %s387, %s389
        %s391 = sld [smem:[#allocation5 + %s390]]
        %p392 = scmp.gt.s32.totalorder %s391, 0
        %s393 = scalar_select %p392, %s391, 0
        %p394 = scmp.lt.s32.totalorder %s393, 63
        %s395 = scalar_select %p394, %s393, 63
        %s396 = sadd.s32 %s395, %s367
        %s397 = smul.addr %s396, 16
        %s398 = scalar_lea.hbm %s1, %s397
        %s399 = scalar_lea.vmem [#allocation2], 1
        %s400 = scalar_lea.sflag [#allocation3], 1
        // Predicated region
        $region45: #{tpu_custom_call.1} parent=39 // pred_check
          _
        $region46: #{tpu_custom_call.1} parent=39 // pred_check_branch
          %402 = sbr.rel target = $region48
        $region47: #{tpu_custom_call.1} parent=39 // pred_region
          %403 = sst [smem:[#allocation10]] [#allocation13]
          %404 = sst [smem:[#allocation11]] [#allocation12]
        $region48: #{tpu_custom_call.1} parent=39 // pred_fallthru
          _
        %406 = shalt.err (0)
        %s408 = sshll.u32 %s399, 4
        %s409 = int_to_ptr.vmem [resolvable:$true] %s408
        %411 = dma.hbm_to_vmem [thread:$0]  %s398, 16, %s409, %s400
        %s412 = sadd.s32 %s352, 2
        %s413 = sshra.s32 %s412, 7
        %s414 = sand.u32 %s412, 127
        %s415 = sadd.s32 %s413, %s33
        %s416 = sadd.s32 %s415, %s356
        %s417 = smul.u32 %s416, 128
        %s418 = sshra.s32 %s412, 7
        %s419 = sand.u32 %s412, 127
        %s420 = sadd.s32 %s417, %s419
        %s421 = sld [smem:[#allocation5 + %s420]]
        %p422 = scmp.gt.s32.totalorder %s421, 0
        %s423 = scalar_select %p422, %s421, 0
        %p424 = scmp.lt.s32.totalorder %s423, 63
        %s425 = scalar_select %p424, %s423, 63
        %s426 = sadd.s32 %s425, %s367
        %s427 = smul.addr %s426, 16
        %s428 = scalar_lea.hbm %s1, %s427
        %s429 = scalar_lea.vmem [#allocation2], 2
        %s430 = scalar_lea.sflag [#allocation3], 2
        // Predicated region
        $region49: #{tpu_custom_call.1} parent=39 // pred_check
          _
        $region50: #{tpu_custom_call.1} parent=39 // pred_check_branch
          %432 = sbr.rel target = $region52
        $region51: #{tpu_custom_call.1} parent=39 // pred_region
          %433 = sst [smem:[#allocation10]] [#allocation15]
          %434 = sst [smem:[#allocation11]] [#allocation14]
        $region52: #{tpu_custom_call.1} parent=39 // pred_fallthru
          _
        %436 = shalt.err (0)
        %s438 = sshll.u32 %s429, 4
        %s439 = int_to_ptr.vmem [resolvable:$true] %s438
        %441 = dma.hbm_to_vmem [thread:$0]  %s428, 16, %s439, %s430
        %s442 = sadd.s32 %s352, 3
        %s443 = sshra.s32 %s442, 7
        %s444 = sand.u32 %s442, 127
        %s445 = sadd.s32 %s443, %s33
        %s446 = sadd.s32 %s445, %s356
        %s447 = smul.u32 %s446, 128
        %s448 = sshra.s32 %s442, 7
        %s449 = sand.u32 %s442, 127
        %s450 = sadd.s32 %s447, %s449
        %s451 = sld [smem:[#allocation5 + %s450]]
        %p452 = scmp.gt.s32.totalorder %s451, 0
        %s453 = scalar_select %p452, %s451, 0
        %p454 = scmp.lt.s32.totalorder %s453, 63
        %s455 = scalar_select %p454, %s453, 63
        %s456 = sadd.s32 %s455, %s367
        %s457 = smul.addr %s456, 16
        %s458 = scalar_lea.hbm %s1, %s457
        %s459 = scalar_lea.vmem [#allocation2], 3
        %s460 = scalar_lea.sflag [#allocation3], 3
        // Predicated region
        $region53: #{tpu_custom_call.1} parent=39 // pred_check
          _
        $region54: #{tpu_custom_call.1} parent=39 // pred_check_branch
          %462 = sbr.rel target = $region56
        $region55: #{tpu_custom_call.1} parent=39 // pred_region
          %463 = sst [smem:[#allocation10]] [#allocation17]
          %464 = sst [smem:[#allocation11]] [#allocation16]
        $region56: #{tpu_custom_call.1} parent=39 // pred_fallthru
          _
        %466 = shalt.err (0)
        %s468 = sshll.u32 %s459, 4
        %s469 = int_to_ptr.vmem [resolvable:$true] %s468
        %471 = dma.hbm_to_vmem [thread:$0]  %s458, 16, %s469, %s460
        %s472 = sadd.s32 %s352, 4
        %s473 = sshra.s32 %s472, 7
        %s474 = sand.u32 %s472, 127
        %s475 = sadd.s32 %s473, %s33
        %s476 = sadd.s32 %s475, %s356
        %s477 = smul.u32 %s476, 128
        %s478 = sshra.s32 %s472, 7
        %s479 = sand.u32 %s472, 127
        %s480 = sadd.s32 %s477, %s479
        %s481 = sld [smem:[#allocation5 + %s480]]
        %p482 = scmp.gt.s32.totalorder %s481, 0
        %s483 = scalar_select %p482, %s481, 0
        %p484 = scmp.lt.s32.totalorder %s483, 63
        %s485 = scalar_select %p484, %s483, 63
        %s486 = sadd.s32 %s485, %s367
        %s487 = smul.addr %s486, 16
        %s488 = scalar_lea.hbm %s1, %s487
        %s489 = scalar_lea.vmem [#allocation2], 4
        %s490 = scalar_lea.sflag [#allocation3], 4
        // Predicated region
        $region57: #{tpu_custom_call.1} parent=39 // pred_check
          _
        $region58: #{tpu_custom_call.1} parent=39 // pred_check_branch
          %492 = sbr.rel target = $region60
        $region59: #{tpu_custom_call.1} parent=39 // pred_region
          %493 = sst [smem:[#allocation10]] [#allocation19]
          %494 = sst [smem:[#allocation11]] [#allocation18]
        $region60: #{tpu_custom_call.1} parent=39 // pred_fallthru
          _
        %496 = shalt.err (0)
        %s498 = sshll.u32 %s489, 4
        %s499 = int_to_ptr.vmem [resolvable:$true] %s498
        %501 = dma.hbm_to_vmem [thread:$0]  %s488, 16, %s499, %s490
        %s502 = sadd.s32 %s352, 5
        %s503 = sshra.s32 %s502, 7
        %s504 = sand.u32 %s502, 127
        %s505 = sadd.s32 %s503, %s33
        %s506 = sadd.s32 %s505, %s356
        %s507 = smul.u32 %s506, 128
        %s508 = sshra.s32 %s502, 7
        %s509 = sand.u32 %s502, 127
        %s510 = sadd.s32 %s507, %s509
        %s511 = sld [smem:[#allocation5 + %s510]]
        %p512 = scmp.gt.s32.totalorder %s511, 0
        %s513 = scalar_select %p512, %s511, 0
        %p514 = scmp.lt.s32.totalorder %s513, 63
        %s515 = scalar_select %p514, %s513, 63
        %s516 = sadd.s32 %s515, %s367
        %s517 = smul.addr %s516, 16
        %s518 = scalar_lea.hbm %s1, %s517
        %s519 = scalar_lea.vmem [#allocation2], 5
        %s520 = scalar_lea.sflag [#allocation3], 5
        // Predicated region
        $region61: #{tpu_custom_call.1} parent=39 // pred_check
          _
        $region62: #{tpu_custom_call.1} parent=39 // pred_check_branch
          %522 = sbr.rel target = $region64
        $region63: #{tpu_custom_call.1} parent=39 // pred_region
          %523 = sst [smem:[#allocation10]] [#allocation21]
          %524 = sst [smem:[#allocation11]] [#allocation20]
        $region64: #{tpu_custom_call.1} parent=39 // pred_fallthru
          _
        %526 = shalt.err (0)
        %s528 = sshll.u32 %s519, 4
        %s529 = int_to_ptr.vmem [resolvable:$true] %s528
        %531 = dma.hbm_to_vmem [thread:$0]  %s518, 16, %s529, %s520
        %s532 = sadd.s32 %s352, 6
        %s533 = sshra.s32 %s532, 7
        %s534 = sand.u32 %s532, 127
        %s535 = sadd.s32 %s533, %s33
        %s536 = sadd.s32 %s535, %s356
        %s537 = smul.u32 %s536, 128
        %s538 = sshra.s32 %s532, 7
        %s539 = sand.u32 %s532, 127
        %s540 = sadd.s32 %s537, %s539
        %s541 = sld [smem:[#allocation5 + %s540]]
        %p542 = scmp.gt.s32.totalorder %s541, 0
        %s543 = scalar_select %p542, %s541, 0
        %p544 = scmp.lt.s32.totalorder %s543, 63
        %s545 = scalar_select %p544, %s543, 63
        %s546 = sadd.s32 %s545, %s367
        %s547 = smul.addr %s546, 16
        %s548 = scalar_lea.hbm %s1, %s547
        %s549 = scalar_lea.vmem [#allocation2], 6
        %s550 = scalar_lea.sflag [#allocation3], 6
        // Predicated region
        $region65: #{tpu_custom_call.1} parent=39 // pred_check
          _
        $region66: #{tpu_custom_call.1} parent=39 // pred_check_branch
          %552 = sbr.rel target = $region68
        $region67: #{tpu_custom_call.1} parent=39 // pred_region
          %553 = sst [smem:[#allocation10]] [#allocation23]
          %554 = sst [smem:[#allocation11]] [#allocation22]
        $region68: #{tpu_custom_call.1} parent=39 // pred_fallthru
          _
        %556 = shalt.err (0)
        %s558 = sshll.u32 %s549, 4
        %s559 = int_to_ptr.vmem [resolvable:$true] %s558
        %561 = dma.hbm_to_vmem [thread:$0]  %s548, 16, %s559, %s550
        %s562 = sadd.s32 %s352, 7
        %s563 = sshra.s32 %s562, 7
        %s564 = sand.u32 %s562, 127
        %s565 = sadd.s32 %s563, %s33
        %s566 = sadd.s32 %s565, %s356
        %s567 = smul.u32 %s566, 128
        %s568 = sshra.s32 %s562, 7
        %s569 = sand.u32 %s562, 127
        %s570 = sadd.s32 %s567, %s569
        %s571 = sld [smem:[#allocation5 + %s570]]
        %p572 = scmp.gt.s32.totalorder %s571, 0
        %s573 = scalar_select %p572, %s571, 0
        %p574 = scmp.lt.s32.totalorder %s573, 63
        %s575 = scalar_select %p574, %s573, 63
        %s576 = sadd.s32 %s575, %s367
        %s577 = smul.addr %s576, 16
        %s578 = scalar_lea.hbm %s1, %s577
        %s579 = scalar_lea.vmem [#allocation2], 7
        %s580 = scalar_lea.sflag [#allocation3], 7
        // Predicated region
        $region69: #{tpu_custom_call.1} parent=39 // pred_check
          _
        $region70: #{tpu_custom_call.1} parent=39 // pred_check_branch
          %582 = sbr.rel target = $region72
        $region71: #{tpu_custom_call.1} parent=39 // pred_region
          %583 = sst [smem:[#allocation10]] [#allocation25]
          %584 = sst [smem:[#allocation11]] [#allocation24]
        $region72: #{tpu_custom_call.1} parent=39 // pred_fallthru
          _
        %586 = shalt.err (0)
        %s588 = sshll.u32 %s579, 4
        %s589 = int_to_ptr.vmem [resolvable:$true] %s588
        %591 = dma.hbm_to_vmem [thread:$0]  %s578, 16, %s589, %s580
        %593 = dma.done [#allocation3], 16
        %595 = dma.done %s400, 16
        %597 = dma.done %s430, 16
        %599 = dma.done %s460, 16
        %601 = dma.done %s490, 16
        %603 = dma.done %s520, 16
        %605 = dma.done %s550, 16
        %607 = dma.done %s580, 16
        %v608 = vld [vmem:[#allocation2] sm:$0xff]
        %v609 = vld [vmem:[%s341] sm:$0xff]
        %v610 = vadd.f32 %v608, %v609
        %v611 = vld [vmem:[%s333] sm:$0xff]
        %vm612 = vcmp.eq.s32.totalorder %v611, 0
        %v613 = vsel %vm612, 1, 0
        %v614 = vcvt.s32.f32 %v613
        %v615 = vld [vmem:[%s345] sm:$0x1]
        %617 = vset.pattern.permute.xlu0 0
        %618 = vperm.xlu0 %617, %v614
        %v619 = vpop.permute.xlu0 %618
        %v621 = vlaneseq
        %v622 = vshrl.u32 %v621, 7
        %v623 = vsub.s32 0, %v622
        %v624 = vrot.slane %v615, %v623
        %v625 = vmul.f32 %v619, %v624
        %v626 = vadd.f32 %v610, %v625
        %vm627 = vcmp.eq.s32.totalorder %v611, 1
        %v628 = vsel %vm627, 1, 0
        %v629 = vcvt.s32.f32 %v628
        %v630 = vld [vmem:[%s345 + $0x1] sm:$0x1]
        %632 = vset.pattern.permute.xlu0 0
        %633 = vperm.xlu0 %632, %v629
        %v634 = vpop.permute.xlu0 %633
        %v636 = vlaneseq
        %v637 = vshrl.u32 %v636, 7
        %v638 = vsub.s32 0, %v637
        %v639 = vrot.slane %v630, %v638
        %v640 = vmul.f32 %v634, %v639
        %v641 = vadd.f32 %v626, %v640
        %vm642 = vcmp.eq.s32.totalorder %v611, 2
        %v643 = vsel %vm642, 1, 0
        %v644 = vcvt.s32.f32 %v643
        %v645 = vld [vmem:[%s345 + $0x2] sm:$0x1]
        %647 = vset.pattern.permute.xlu0 0
        %648 = vperm.xlu0 %647, %v644
        %v649 = vpop.permute.xlu0 %648
        %v651 = vlaneseq
        %v652 = vshrl.u32 %v651, 7
        %v653 = vsub.s32 0, %v652
        %v654 = vrot.slane %v645, %v653
        %v655 = vmul.f32 %v649, %v654
        %v656 = vadd.f32 %v641, %v655
        %657 = vadd.xlane.f32.xlu0 %v656
        %v658 = vpop.xlane.xlu0 %657
        %v659 = vmul.f32 %v656, %v656
        %660 = vadd.xlane.f32.xlu0 %v659
        %v661 = vpop.xlane.xlu0 %660
        %v662 = vmul.f32 %v658, 0.0078125
        %v663 = vmul.f32 %v661, 0.0078125
        %v664 = vmul.f32 %v662, %v662
        %v665 = vsub.f32 %v663, %v664
        %v666 = vadd.f32 %v665, 1e-06
        %v667 = vrsqrt.pop %v666
        %v668 = vsub.f32 %v656, %v662
        %v669 = vmul.f32 %v668, %v667
        %v670 = vld [vmem:[%s348] sm:$0x1]
        %v672 = vlaneseq
        %v673 = vshrl.u32 %v672, 7
        %v674 = vsub.s32 0, %v673
        %v675 = vrot.slane %v670, %v674
        %v677 = vmul.f32 %v669, %v675
        %v678 = vld [vmem:[%s351] sm:$0x1]
        %v680 = vlaneseq
        %v681 = vshrl.u32 %v680, 7
        %v682 = vsub.s32 0, %v681
        %v683 = vrot.slane %v678, %v682
        %v685 = vadd.f32 %v677, %v683
        %686 = vst [vmem:[%s322] sm:$0xff] %v685
        %s687 = sand.u32 %s194, 1
        %s688 = scalar_lea.sflag [#allocation7], %s687
        %s689 = sand.u32 %s194, 1
        %s690 = smul.addr %s689, 8
        %s691 = scalar_lea.vmem [#allocation6], %s690
        // Predicated region
        $region73: #{tpu_custom_call.1} parent=39 // pred_check
          %p692 = pneg %p204
        $region74: #{tpu_custom_call.1} parent=39 // pred_check_branch
          %694 = sbr.rel (%p692) target = $region76
        $region75: #{tpu_custom_call.1} parent=39 // pred_region
          %s696 = ssub.s32 128, 128
          %697 = vsyncadd %s688, %s696
          %s698 = sadd.s32 %s34, %s33
          %s699 = smul.addr %s32, 2
          %s700 = sadd.s32 %s698, %s699
          %s701 = smul.addr %s700, 128
          %s702 = scalar_lea.hbm %s7, %s701
          %s704 = sshll.u32 %s691, 4
          %s705 = int_to_ptr.vmem [resolvable:$true] %s704
          %707 = dma.vmem_to_hbm [thread:$0]  %s705, 128, %s702, %s688
        $region76: #{tpu_custom_call.1} parent=39 // pred_fallthru
          _
      $region40: #{tpu_custom_call.1} parent=5 // pred_fallthru
        _
      %p708 = scmp.le.s32.totalorder 2, %s22
      // Predicated region
      $region77: #{tpu_custom_call.1} parent=5 // pred_check
        %p709 = pneg %p708
      $region78: #{tpu_custom_call.1} parent=5 // pred_check_branch
        %711 = sbr.rel (%p709) target = $region80
      $region79: #{tpu_custom_call.1} parent=5 // pred_region
        %s712 = ssub.s32 %s22, 2
        // Predicated region
        $region81: #{tpu_custom_call.1} parent=79 // pred_check
          %p713 = pneg %p210
        $region82: #{tpu_custom_call.1} parent=79 // pred_check_branch
          %715 = sbr.rel (%p713) target = $region84
        $region83: #{tpu_custom_call.1} parent=79 // pred_region
          %s716 = sand.u32 %s195, 1
          %s717 = scalar_lea.sflag [#allocation7], %s716
          %s718 = sand.u32 %s195, 1
          %s719 = smul.addr %s718, 8
          %s720 = scalar_lea.vmem [#allocation6], %s719
          %721 = dma.done %s717, 128
        $region84: #{tpu_custom_call.1} parent=79 // pred_fallthru
          _
      $region80: #{tpu_custom_call.1} parent=5 // pred_fallthru
        _
    $region6: #{tpu_custom_call.1} parent=1 // loop_footer
      %s26 = sadd.s32 1, %s22
    $region7: #{tpu_custom_call.1} parent=1 // loop_footer_branch
      %21 = sbr.rel target = $region3
    $region8: #{tpu_custom_call.1} parent=1 // loop_exit
      _
    %722 = vsyncpa [#allocation7], 1
    %s723 = scalar_lea.sflag [#allocation7], 1
    %724 = vsyncpa %s723, 1
  %725 = vsyncmov [#allocation3]
  %s726 = vpop.sfrf %725
  %p727 = scmp.eq.s32.totalorder %s726, 0
  %p728 = pneg %p727
  %730 = shalt.err (%p728)
  %s731 = scalar_lea.sflag [#allocation3], 1
  %732 = vsyncmov %s731
  %s733 = vpop.sfrf %732
  %p734 = scmp.eq.s32.totalorder %s733, 0
  %p735 = pneg %p734
  %737 = shalt.err (%p735)
  %s738 = scalar_lea.sflag [#allocation3], 2
  %739 = vsyncmov %s738
  %s740 = vpop.sfrf %739
  %p741 = scmp.eq.s32.totalorder %s740, 0
  %p742 = pneg %p741
  %744 = shalt.err (%p742)
  %s745 = scalar_lea.sflag [#allocation3], 3
  %746 = vsyncmov %s745
  %s747 = vpop.sfrf %746
  %p748 = scmp.eq.s32.totalorder %s747, 0
  %p749 = pneg %p748
  %751 = shalt.err (%p749)
  %s752 = scalar_lea.sflag [#allocation3], 4
  %753 = vsyncmov %s752
  %s754 = vpop.sfrf %753
  %p755 = scmp.eq.s32.totalorder %s754, 0
  %p756 = pneg %p755
  %758 = shalt.err (%p756)
  %s759 = scalar_lea.sflag [#allocation3], 5
  %760 = vsyncmov %s759
  %s761 = vpop.sfrf %760
  %p762 = scmp.eq.s32.totalorder %s761, 0
  %p763 = pneg %p762
  %765 = shalt.err (%p763)
  %s766 = scalar_lea.sflag [#allocation3], 6
  %767 = vsyncmov %s766
  %s768 = vpop.sfrf %767
  %p769 = scmp.eq.s32.totalorder %s768, 0
  %p770 = pneg %p769
  %772 = shalt.err (%p770)
  %s773 = scalar_lea.sflag [#allocation3], 7
  %774 = vsyncmov %s773
  %s775 = vpop.sfrf %774
  %p776 = scmp.eq.s32.totalorder %s775, 0
  %p777 = pneg %p776
  %779 = shalt.err (%p777)

</llo_original>
